<compile_context>
chip_gen: v5e
topology: v5e:2x2
jax: 0.10.0
libtpu: 0.0.40
codegen_flags: <defaults>
</compile_context>

<pallas_src>
import jax
import jax.numpy as jnp
from jax.experimental import pallas as pl
from jax.experimental.pallas import tpu as pltpu


def _uncertainty_navigator_kernel(x_ref, mi_ref, unc_ref,
                                  wx_ref, bx_ref, wm_ref, bm_ref,
                                  wp_ref, bp_ref, out_ref):
    """One (batch-tile, spatial-tile) block per grid step.

    x_ref  : (BT, IC, R, L) input feature tile            (VMEM)
    mi_ref : (BT, CM, R, L) mutual-info tile (un-repeated) (VMEM)
    unc_ref: (BT, 1,  R, L) pixel-wise uncertainty tile    (VMEM)
    w*/b*  : fused conv+BN weights/biases, flattened 1-D   (SMEM scalars)
    out_ref: (BT, IC, R, L)
    """
    ic = x_ref.shape[1]
    cm = mi_ref.shape[1]
    init = bx_ref.shape[0]

    # Certainty map on a dense (BT, R, L) slab (EUP exp).
    cert = jnp.exp(-unc_ref[:, 0].astype(jnp.float32))

    # xs = x * cert, per input channel (dense VPU slabs).
    xs = [x_ref[:, c].astype(jnp.float32) * cert for c in range(ic)]
    mi = [mi_ref[:, c].astype(jnp.float32) for c in range(cm)]

    # Fused W_x(xs) + W_m(mi) -> ReLU -> psi-conv accumulation.
    # Weights are SMEM scalars -> scalar-operand FMAs, one live accumulator.
    psi_lin = None
    for o in range(init):
        acc = xs[0] * wx_ref[o * ic]
        for c in range(1, ic):
            acc = acc + xs[c] * wx_ref[o * ic + c]
        for c in range(cm):
            acc = acc + mi[c] * wm_ref[o * cm + c]
        acc = jnp.maximum(acc + (bx_ref[o] + bm_ref[o]), 0.0)   # ReLU
        term = acc * wp_ref[o]
        psi_lin = term if psi_lin is None else psi_lin + term

    psi = 1.0 / (1.0 + jnp.exp(-(psi_lin + bp_ref[0])))          # sigmoid

    for c in range(ic):
        out_ref[:, c] = (xs[c] * psi).astype(out_ref.dtype)


def _fuse_conv_bn(w, b, gamma, beta, mean, var, eps):
    """Fold eval-mode BatchNorm into the preceding 1x1 conv (pure param math)."""
    s = gamma / jnp.sqrt(var + eps)
    return w * s[:, None], (b - mean) * s + beta


def _choose_tiling(n, rt, ic, cm, init, in_bytes):
    """Pick (batch_tile, row_tile) of 128-lane rows per grid step.

    Sized so the per-step footprint (double-buffered I/O + f32 intermediates)
    stays around ~24 MiB -> safe under v7x's 64 MiB VMEM with a 48 MiB scoped
    limit, while each step moves MiB-scale data (per-step overhead amortized).
    """
    io_per_row = 2 * in_bytes * 128 * (2 * ic + cm + 1)     # x, out, mi, unc (x2 bufs)
    tmp_per_row = 4 * 128 * (ic + cm + init + 2)            # f32 intermediates
    per_row = io_per_row + tmp_per_row
    row_budget = max(1, (24 * 1024 * 1024) // per_row)

    # Spatial rows per block: a multiple of 8 (dense sublanes) dividing rt,
    # or the full rt (always a legal block dim).
    if rt <= row_budget:
        r = rt
    else:
        r = rt  # TODO(synk): if rt has no multiple-of-8 divisor <= budget this
                # falls back to the full spatial extent per step.
        cand = (row_budget // 8) * 8
        while cand >= 8:
            if rt % cand == 0:
                r = cand
                break
            cand -= 8

    # Fold batch elements into the block when the whole spatial extent fits,
    # but keep >=2 grid steps when possible (both v7x TensorCores busy).
    bt = 1
    if r == rt and n > 1:
        limit = max(1, row_budget // max(r, 1))
        for cand in range(min(n, limit), 0, -1):
            if n % cand == 0 and (n // cand) * (rt // r) >= 2:
                bt = cand
                break
    return bt, r


def uncertainty_navigator(x, mut_info, mut_unc, repeat_times, params, eps=1e-5):
    """x: (N,IC,H,W); mut_info: (N,IC//repeat_times,H,W); mut_unc: (N,1,H,W)."""
    N, IC, H, W = x.shape
    CM = mut_info.shape[1]
    assert CM * repeat_times == IC, "repeat_times * mut_info channels must equal in_channels"
    HW = H * W
    INIT = params["wx"].shape[0]

    # Fold BatchNorm (eval mode) into the 1x1 conv weights / biases.
    wx, bx = _fuse_conv_bn(params["wx"], params["bx"], params["gx"],
                           params["betax"], params["mx"], params["vx"], eps)
    wm, bm = _fuse_conv_bn(params["wm"], params["bm"], params["gm"],
                           params["betam"], params["mm"], params["vm"], eps)
    wp, bp = _fuse_conv_bn(params["wp"], params["bp"], params["gp"],
                           params["betap"], params["mp"], params["vp"], eps)

    # Fold the channel repeat (torch.repeat == block-tile) of mut_info into W_m:
    #   conv(repeat(m)) == conv_folded(m),  w_folded[o,c] = sum_r w[o, r*CM + c]
    wm = wm.reshape(INIT, repeat_times, CM).sum(axis=1)

    # NCHW -> (N, C, HW//128, 128): pure reshape; spatial fills sublanes+lanes.
    L = 128 if HW % 128 == 0 else HW
    RT = HW // L
    x4 = x.reshape(N, IC, RT, L)
    mi4 = mut_info.reshape(N, CM, RT, L)
    unc4 = mut_unc.reshape(N, 1, RT, L)

    BT, R = _choose_tiling(N, RT, IC, CM, INIT, x.dtype.itemsize)
    grid = (N // BT, RT // R)

    smem = pl.BlockSpec(memory_space=pltpu.MemorySpace.SMEM)

    out4 = pl.pallas_call(
        _uncertainty_navigator_kernel,
        out_shape=jax.ShapeDtypeStruct((N, IC, RT, L), x.dtype),
        grid=grid,
        in_specs=[
            pl.BlockSpec((BT, IC, R, L), lambda nb, s: (nb, 0, s, 0)),
            pl.BlockSpec((BT, CM, R, L), lambda nb, s: (nb, 0, s, 0)),
            pl.BlockSpec((BT, 1, R, L), lambda nb, s: (nb, 0, s, 0)),
            smem, smem, smem, smem, smem, smem,
        ],
        out_specs=pl.BlockSpec((BT, IC, R, L), lambda nb, s: (nb, 0, s, 0)),
        compiler_params=pltpu.CompilerParams(
            dimension_semantics=("parallel", "parallel"),
            vmem_limit_bytes=48 * 1024 * 1024),
    )(x4, mi4, unc4,
      wx.reshape(-1).astype(jnp.float32), bx.astype(jnp.float32),
      wm.reshape(-1).astype(jnp.float32), bm.astype(jnp.float32),
      wp.reshape(-1).astype(jnp.float32), bp.astype(jnp.float32))

    return out4.reshape(N, IC, H, W)


def _reference(x, mut_info, mut_unc, repeat_times, params, eps=1e-5):
    """Pure-JAX reference matching the PyTorch module (eval-mode BN)."""
    def conv1x1(inp, w, b):
        return jnp.einsum("oc,nchw->nohw", w, inp) + b[None, :, None, None]

    def bn(inp, gamma, beta, mean, var):
        s = gamma / jnp.sqrt(var + eps)
        return inp * s[None, :, None, None] + (beta - mean * s)[None, :, None, None]

    cert = jnp.exp(-mut_unc)
    xs = x * cert
    mi = jnp.tile(mut_info, (1, repeat_times, 1, 1))
    x_init = bn(conv1x1(xs, params["wx"], params["bx"]),
                params["gx"], params["betax"], params["mx"], params["vx"])
    m_init = bn(conv1x1(mi, params["wm"], params["bm"]),
                params["gm"], params["betam"], params["mm"], params["vm"])
    p = jnp.maximum(x_init + m_init, 0.0)
    p = bn(conv1x1(p, params["wp"], params["bp"]),
           params["gp"], params["betap"], params["mp"], params["vp"])
    psi = 1.0 / (1.0 + jnp.exp(-p))
    return xs * psi


if __name__ == "__main__":
    # UncertaintyNavigator(in_channels=4, init_channels=8), repeat_times=2
    N, IC, INIT, H, W = 2, 4, 8, 16, 16
    REPEAT = 2
    CM = IC // REPEAT

    key = jax.random.PRNGKey(0)
    ks = jax.random.split(key, 21)
    x = jax.random.normal(ks[0], (N, IC, H, W), jnp.float32)
    mut_info = jax.random.normal(ks[1], (N, CM, H, W), jnp.float32)
    mut_unc = jnp.abs(jax.random.normal(ks[2], (N, 1, H, W), jnp.float32))

    params = dict(
        # W_x: Conv1x1(IC->INIT, bias) + BN(INIT)
        wx=jax.random.normal(ks[3], (INIT, IC), jnp.float32) * 0.3,
        bx=jax.random.normal(ks[4], (INIT,), jnp.float32) * 0.1,
        gx=1.0 + 0.1 * jax.random.normal(ks[5], (INIT,), jnp.float32),
        betax=0.1 * jax.random.normal(ks[6], (INIT,), jnp.float32),
        mx=0.1 * jax.random.normal(ks[7], (INIT,), jnp.float32),
        vx=0.5 + jnp.abs(jax.random.normal(ks[8], (INIT,), jnp.float32)),
        # W_m: Conv1x1(IC->INIT, bias) + BN(INIT)
        wm=jax.random.normal(ks[9], (INIT, IC), jnp.float32) * 0.3,
        bm=jax.random.normal(ks[10], (INIT,), jnp.float32) * 0.1,
        gm=1.0 + 0.1 * jax.random.normal(ks[11], (INIT,), jnp.float32),
        betam=0.1 * jax.random.normal(ks[12], (INIT,), jnp.float32),
        mm=0.1 * jax.random.normal(ks[13], (INIT,), jnp.float32),
        vm=0.5 + jnp.abs(jax.random.normal(ks[14], (INIT,), jnp.float32)),
        # psi: Conv1x1(INIT->1, bias) + BN(1) + Sigmoid
        wp=jax.random.normal(ks[15], (1, INIT), jnp.float32) * 0.3,
        bp=jax.random.normal(ks[16], (1,), jnp.float32) * 0.1,
        gp=1.0 + 0.1 * jax.random.normal(ks[17], (1,), jnp.float32),
        betap=0.1 * jax.random.normal(ks[18], (1,), jnp.float32),
        mp=0.1 * jax.random.normal(ks[19], (1,), jnp.float32),
        vp=0.5 + jnp.abs(jax.random.normal(ks[20], (1,), jnp.float32)),
    )

    out = uncertainty_navigator(x, mut_info, mut_unc, REPEAT, params)
    out = jax.block_until_ready(out)

    ref = _reference(x, mut_info, mut_unc, REPEAT, params)
    assert out.shape == ref.shape == (N, IC, H, W), (out.shape, ref.shape)
    assert jnp.allclose(out, ref, atol=1e-4, rtol=1e-4), \
        float(jnp.max(jnp.abs(out - ref)))

    print("KERNEL_OK")
</pallas_src>

<mosaic_0001>
module attributes {stable_mosaic.version = 11 : i64} {
  func.func @_uncertainty_navigator_kernel(%arg0: i32, %arg1: i32, %arg2: memref<1x4x2x128xf32, #tpu.memory_space<vmem>>, %arg3: memref<1x2x2x128xf32, #tpu.memory_space<vmem>>, %arg4: memref<1x1x2x128xf32, #tpu.memory_space<vmem>>, %arg5: memref<32xf32, #tpu.memory_space<smem>>, %arg6: memref<8xf32, #tpu.memory_space<smem>>, %arg7: memref<16xf32, #tpu.memory_space<smem>>, %arg8: memref<8xf32, #tpu.memory_space<smem>>, %arg9: memref<8xf32, #tpu.memory_space<smem>>, %arg10: memref<1xf32, #tpu.memory_space<smem>>, %arg11: memref<1x4x2x128xf32, #tpu.memory_space<vmem>>) attributes {dimension_semantics = [#tpu.dimension_semantics<parallel>, #tpu.dimension_semantics<parallel>], iteration_bounds = array<i64: 2, 1>, scalar_prefetch = 0 : i64, scratch_operands = 0 : i64, tpu.core_type = #tpu.core_type<tc>, window_params = [{transform_indices = @transform_0, window_bounds = array<i64: 1, 4, 2, 128>}, {transform_indices = @transform_1, window_bounds = array<i64: 1, 2, 2, 128>}, {transform_indices = @transform_2, window_bounds = array<i64: 1, 1, 2, 128>}, {transform_indices = @transform_3, window_bounds = array<i64: 32>}, {transform_indices = @transform_4, window_bounds = array<i64: 8>}, {transform_indices = @transform_5, window_bounds = array<i64: 16>}, {transform_indices = @transform_6, window_bounds = array<i64: 8>}, {transform_indices = @transform_7, window_bounds = array<i64: 8>}, {transform_indices = @transform_8, window_bounds = array<i64: 1>}, {transform_indices = @transform_9, window_bounds = array<i64: 1, 4, 2, 128>}]} {
    %c0 = arith.constant 0 : index
    %c0_0 = arith.constant 0 : index
    %c0_1 = arith.constant 0 : index
    %c0_2 = arith.constant 0 : index
    %0 = vector.load %arg4[%c0, %c0_0, %c0_1, %c0_2] : memref<1x1x2x128xf32, #tpu.memory_space<vmem>>, vector<1x1x2x128xf32>
    %1 = vector.shape_cast %0 : vector<1x1x2x128xf32> to vector<1x2x128xf32>
    %cst = arith.constant 0.000000e+00 : f32
    %2 = vector.broadcast %cst : f32 to vector<1x2x128xf32>
    %3 = arith.subf %2, %1 : vector<1x2x128xf32>
    %4 = math.exp %3 : vector<1x2x128xf32>
    %c0_3 = arith.constant 0 : index
    %c0_4 = arith.constant 0 : index
    %c0_5 = arith.constant 0 : index
    %c0_6 = arith.constant 0 : index
    %5 = vector.load %arg2[%c0_3, %c0_4, %c0_5, %c0_6] : memref<1x4x2x128xf32, #tpu.memory_space<vmem>>, vector<1x1x2x128xf32>
    %6 = vector.shape_cast %5 : vector<1x1x2x128xf32> to vector<1x2x128xf32>
    %7 = arith.mulf %6, %4 : vector<1x2x128xf32>
    %c0_7 = arith.constant 0 : index
    %c1 = arith.constant 1 : index
    %c0_8 = arith.constant 0 : index
    %c0_9 = arith.constant 0 : index
    %8 = vector.load %arg2[%c0_7, %c1, %c0_8, %c0_9] : memref<1x4x2x128xf32, #tpu.memory_space<vmem>>, vector<1x1x2x128xf32>
    %9 = vector.shape_cast %8 : vector<1x1x2x128xf32> to vector<1x2x128xf32>
    %10 = arith.mulf %9, %4 : vector<1x2x128xf32>
    %c0_10 = arith.constant 0 : index
    %c2 = arith.constant 2 : index
    %c0_11 = arith.constant 0 : index
    %c0_12 = arith.constant 0 : index
    %11 = vector.load %arg2[%c0_10, %c2, %c0_11, %c0_12] : memref<1x4x2x128xf32, #tpu.memory_space<vmem>>, vector<1x1x2x128xf32>
    %12 = vector.shape_cast %11 : vector<1x1x2x128xf32> to vector<1x2x128xf32>
    %13 = arith.mulf %12, %4 : vector<1x2x128xf32>
    %c0_13 = arith.constant 0 : index
    %c3 = arith.constant 3 : index
    %c0_14 = arith.constant 0 : index
    %c0_15 = arith.constant 0 : index
    %14 = vector.load %arg2[%c0_13, %c3, %c0_14, %c0_15] : memref<1x4x2x128xf32, #tpu.memory_space<vmem>>, vector<1x1x2x128xf32>
    %15 = vector.shape_cast %14 : vector<1x1x2x128xf32> to vector<1x2x128xf32>
    %16 = arith.mulf %15, %4 : vector<1x2x128xf32>
    %c0_16 = arith.constant 0 : index
    %c0_17 = arith.constant 0 : index
    %c0_18 = arith.constant 0 : index
    %c0_19 = arith.constant 0 : index
    %17 = vector.load %arg3[%c0_16, %c0_17, %c0_18, %c0_19] : memref<1x2x2x128xf32, #tpu.memory_space<vmem>>, vector<1x1x2x128xf32>
    %18 = vector.shape_cast %17 : vector<1x1x2x128xf32> to vector<1x2x128xf32>
    %c0_20 = arith.constant 0 : index
    %c1_21 = arith.constant 1 : index
    %c0_22 = arith.constant 0 : index
    %c0_23 = arith.constant 0 : index
    %19 = vector.load %arg3[%c0_20, %c1_21, %c0_22, %c0_23] : memref<1x2x2x128xf32, #tpu.memory_space<vmem>>, vector<1x1x2x128xf32>
    %20 = vector.shape_cast %19 : vector<1x1x2x128xf32> to vector<1x2x128xf32>
    %c0_24 = arith.constant 0 : index
    %21 = memref.load %arg5[%c0_24] : memref<32xf32, #tpu.memory_space<smem>>
    %22 = vector.broadcast %21 : f32 to vector<1x2x128xf32>
    %23 = arith.mulf %7, %22 : vector<1x2x128xf32>
    %c1_25 = arith.constant 1 : index
    %24 = memref.load %arg5[%c1_25] : memref<32xf32, #tpu.memory_space<smem>>
    %25 = vector.broadcast %24 : f32 to vector<1x2x128xf32>
    %26 = arith.mulf %10, %25 : vector<1x2x128xf32>
    %27 = arith.addf %23, %26 : vector<1x2x128xf32>
    %c2_26 = arith.constant 2 : index
    %28 = memref.load %arg5[%c2_26] : memref<32xf32, #tpu.memory_space<smem>>
    %29 = vector.broadcast %28 : f32 to vector<1x2x128xf32>
    %30 = arith.mulf %13, %29 : vector<1x2x128xf32>
    %31 = arith.addf %27, %30 : vector<1x2x128xf32>
    %c3_27 = arith.constant 3 : index
    %32 = memref.load %arg5[%c3_27] : memref<32xf32, #tpu.memory_space<smem>>
    %33 = vector.broadcast %32 : f32 to vector<1x2x128xf32>
    %34 = arith.mulf %16, %33 : vector<1x2x128xf32>
    %35 = arith.addf %31, %34 : vector<1x2x128xf32>
    %c0_28 = arith.constant 0 : index
    %36 = memref.load %arg7[%c0_28] : memref<16xf32, #tpu.memory_space<smem>>
    %37 = vector.broadcast %36 : f32 to vector<1x2x128xf32>
    %38 = arith.mulf %18, %37 : vector<1x2x128xf32>
    %39 = arith.addf %35, %38 : vector<1x2x128xf32>
    %c1_29 = arith.constant 1 : index
    %40 = memref.load %arg7[%c1_29] : memref<16xf32, #tpu.memory_space<smem>>
    %41 = vector.broadcast %40 : f32 to vector<1x2x128xf32>
    %42 = arith.mulf %20, %41 : vector<1x2x128xf32>
    %43 = arith.addf %39, %42 : vector<1x2x128xf32>
    %c0_30 = arith.constant 0 : index
    %44 = memref.load %arg6[%c0_30] : memref<8xf32, #tpu.memory_space<smem>>
    %c0_31 = arith.constant 0 : index
    %45 = memref.load %arg8[%c0_31] : memref<8xf32, #tpu.memory_space<smem>>
    %46 = arith.addf %44, %45 : f32
    %47 = vector.broadcast %46 : f32 to vector<1x2x128xf32>
    %48 = arith.addf %43, %47 : vector<1x2x128xf32>
    %cst_32 = arith.constant 0.000000e+00 : f32
    %49 = vector.broadcast %cst_32 : f32 to vector<1x2x128xf32>
    %50 = arith.maximumf %48, %49 : vector<1x2x128xf32>
    %c0_33 = arith.constant 0 : index
    %51 = memref.load %arg9[%c0_33] : memref<8xf32, #tpu.memory_space<smem>>
    %52 = vector.broadcast %51 : f32 to vector<1x2x128xf32>
    %53 = arith.mulf %50, %52 : vector<1x2x128xf32>
    %c4 = arith.constant 4 : index
    %54 = memref.load %arg5[%c4] : memref<32xf32, #tpu.memory_space<smem>>
    %55 = vector.broadcast %54 : f32 to vector<1x2x128xf32>
    %56 = arith.mulf %7, %55 : vector<1x2x128xf32>
    %c5 = arith.constant 5 : index
    %57 = memref.load %arg5[%c5] : memref<32xf32, #tpu.memory_space<smem>>
    %58 = vector.broadcast %57 : f32 to vector<1x2x128xf32>
    %59 = arith.mulf %10, %58 : vector<1x2x128xf32>
    %60 = arith.addf %56, %59 : vector<1x2x128xf32>
    %c6 = arith.constant 6 : index
    %61 = memref.load %arg5[%c6] : memref<32xf32, #tpu.memory_space<smem>>
    %62 = vector.broadcast %61 : f32 to vector<1x2x128xf32>
    %63 = arith.mulf %13, %62 : vector<1x2x128xf32>
    %64 = arith.addf %60, %63 : vector<1x2x128xf32>
    %c7 = arith.constant 7 : index
    %65 = memref.load %arg5[%c7] : memref<32xf32, #tpu.memory_space<smem>>
    %66 = vector.broadcast %65 : f32 to vector<1x2x128xf32>
    %67 = arith.mulf %16, %66 : vector<1x2x128xf32>
    %68 = arith.addf %64, %67 : vector<1x2x128xf32>
    %c2_34 = arith.constant 2 : index
    %69 = memref.load %arg7[%c2_34] : memref<16xf32, #tpu.memory_space<smem>>
    %70 = vector.broadcast %69 : f32 to vector<1x2x128xf32>
    %71 = arith.mulf %18, %70 : vector<1x2x128xf32>
    %72 = arith.addf %68, %71 : vector<1x2x128xf32>
    %c3_35 = arith.constant 3 : index
    %73 = memref.load %arg7[%c3_35] : memref<16xf32, #tpu.memory_space<smem>>
    %74 = vector.broadcast %73 : f32 to vector<1x2x128xf32>
    %75 = arith.mulf %20, %74 : vector<1x2x128xf32>
    %76 = arith.addf %72, %75 : vector<1x2x128xf32>
    %c1_36 = arith.constant 1 : index
    %77 = memref.load %arg6[%c1_36] : memref<8xf32, #tpu.memory_space<smem>>
    %c1_37 = arith.constant 1 : index
    %78 = memref.load %arg8[%c1_37] : memref<8xf32, #tpu.memory_space<smem>>
    %79 = arith.addf %77, %78 : f32
    %80 = vector.broadcast %79 : f32 to vector<1x2x128xf32>
    %81 = arith.addf %76, %80 : vector<1x2x128xf32>
    %cst_38 = arith.constant 0.000000e+00 : f32
    %82 = vector.broadcast %cst_38 : f32 to vector<1x2x128xf32>
    %83 = arith.maximumf %81, %82 : vector<1x2x128xf32>
    %c1_39 = arith.constant 1 : index
    %84 = memref.load %arg9[%c1_39] : memref<8xf32, #tpu.memory_space<smem>>
    %85 = vector.broadcast %84 : f32 to vector<1x2x128xf32>
    %86 = arith.mulf %83, %85 : vector<1x2x128xf32>
    %87 = arith.addf %53, %86 : vector<1x2x128xf32>
    %c8 = arith.constant 8 : index
    %88 = memref.load %arg5[%c8] : memref<32xf32, #tpu.memory_space<smem>>
    %89 = vector.broadcast %88 : f32 to vector<1x2x128xf32>
    %90 = arith.mulf %7, %89 : vector<1x2x128xf32>
    %c9 = arith.constant 9 : index
    %91 = memref.load %arg5[%c9] : memref<32xf32, #tpu.memory_space<smem>>
    %92 = vector.broadcast %91 : f32 to vector<1x2x128xf32>
    %93 = arith.mulf %10, %92 : vector<1x2x128xf32>
    %94 = arith.addf %90, %93 : vector<1x2x128xf32>
    %c10 = arith.constant 10 : index
    %95 = memref.load %arg5[%c10] : memref<32xf32, #tpu.memory_space<smem>>
    %96 = vector.broadcast %95 : f32 to vector<1x2x128xf32>
    %97 = arith.mulf %13, %96 : vector<1x2x128xf32>
    %98 = arith.addf %94, %97 : vector<1x2x128xf32>
    %c11 = arith.constant 11 : index
    %99 = memref.load %arg5[%c11] : memref<32xf32, #tpu.memory_space<smem>>
    %100 = vector.broadcast %99 : f32 to vector<1x2x128xf32>
    %101 = arith.mulf %16, %100 : vector<1x2x128xf32>
    %102 = arith.addf %98, %101 : vector<1x2x128xf32>
    %c4_40 = arith.constant 4 : index
    %103 = memref.load %arg7[%c4_40] : memref<16xf32, #tpu.memory_space<smem>>
    %104 = vector.broadcast %103 : f32 to vector<1x2x128xf32>
    %105 = arith.mulf %18, %104 : vector<1x2x128xf32>
    %106 = arith.addf %102, %105 : vector<1x2x128xf32>
    %c5_41 = arith.constant 5 : index
    %107 = memref.load %arg7[%c5_41] : memref<16xf32, #tpu.memory_space<smem>>
    %108 = vector.broadcast %107 : f32 to vector<1x2x128xf32>
    %109 = arith.mulf %20, %108 : vector<1x2x128xf32>
    %110 = arith.addf %106, %109 : vector<1x2x128xf32>
    %c2_42 = arith.constant 2 : index
    %111 = memref.load %arg6[%c2_42] : memref<8xf32, #tpu.memory_space<smem>>
    %c2_43 = arith.constant 2 : index
    %112 = memref.load %arg8[%c2_43] : memref<8xf32, #tpu.memory_space<smem>>
    %113 = arith.addf %111, %112 : f32
    %114 = vector.broadcast %113 : f32 to vector<1x2x128xf32>
    %115 = arith.addf %110, %114 : vector<1x2x128xf32>
    %cst_44 = arith.constant 0.000000e+00 : f32
    %116 = vector.broadcast %cst_44 : f32 to vector<1x2x128xf32>
    %117 = arith.maximumf %115, %116 : vector<1x2x128xf32>
    %c2_45 = arith.constant 2 : index
    %118 = memref.load %arg9[%c2_45] : memref<8xf32, #tpu.memory_space<smem>>
    %119 = vector.broadcast %118 : f32 to vector<1x2x128xf32>
    %120 = arith.mulf %117, %119 : vector<1x2x128xf32>
    %121 = arith.addf %87, %120 : vector<1x2x128xf32>
    %c12 = arith.constant 12 : index
    %122 = memref.load %arg5[%c12] : memref<32xf32, #tpu.memory_space<smem>>
    %123 = vector.broadcast %122 : f32 to vector<1x2x128xf32>
    %124 = arith.mulf %7, %123 : vector<1x2x128xf32>
    %c13 = arith.constant 13 : index
    %125 = memref.load %arg5[%c13] : memref<32xf32, #tpu.memory_space<smem>>
    %126 = vector.broadcast %125 : f32 to vector<1x2x128xf32>
    %127 = arith.mulf %10, %126 : vector<1x2x128xf32>
    %128 = arith.addf %124, %127 : vector<1x2x128xf32>
    %c14 = arith.constant 14 : index
    %129 = memref.load %arg5[%c14] : memref<32xf32, #tpu.memory_space<smem>>
    %130 = vector.broadcast %129 : f32 to vector<1x2x128xf32>
    %131 = arith.mulf %13, %130 : vector<1x2x128xf32>
    %132 = arith.addf %128, %131 : vector<1x2x128xf32>
    %c15 = arith.constant 15 : index
    %133 = memref.load %arg5[%c15] : memref<32xf32, #tpu.memory_space<smem>>
    %134 = vector.broadcast %133 : f32 to vector<1x2x128xf32>
    %135 = arith.mulf %16, %134 : vector<1x2x128xf32>
    %136 = arith.addf %132, %135 : vector<1x2x128xf32>
    %c6_46 = arith.constant 6 : index
    %137 = memref.load %arg7[%c6_46] : memref<16xf32, #tpu.memory_space<smem>>
    %138 = vector.broadcast %137 : f32 to vector<1x2x128xf32>
    %139 = arith.mulf %18, %138 : vector<1x2x128xf32>
    %140 = arith.addf %136, %139 : vector<1x2x128xf32>
    %c7_47 = arith.constant 7 : index
    %141 = memref.load %arg7[%c7_47] : memref<16xf32, #tpu.memory_space<smem>>
    %142 = vector.broadcast %141 : f32 to vector<1x2x128xf32>
    %143 = arith.mulf %20, %142 : vector<1x2x128xf32>
    %144 = arith.addf %140, %143 : vector<1x2x128xf32>
    %c3_48 = arith.constant 3 : index
    %145 = memref.load %arg6[%c3_48] : memref<8xf32, #tpu.memory_space<smem>>
    %c3_49 = arith.constant 3 : index
    %146 = memref.load %arg8[%c3_49] : memref<8xf32, #tpu.memory_space<smem>>
    %147 = arith.addf %145, %146 : f32
    %148 = vector.broadcast %147 : f32 to vector<1x2x128xf32>
    %149 = arith.addf %144, %148 : vector<1x2x128xf32>
    %cst_50 = arith.constant 0.000000e+00 : f32
    %150 = vector.broadcast %cst_50 : f32 to vector<1x2x128xf32>
    %151 = arith.maximumf %149, %150 : vector<1x2x128xf32>
    %c3_51 = arith.constant 3 : index
    %152 = memref.load %arg9[%c3_51] : memref<8xf32, #tpu.memory_space<smem>>
    %153 = vector.broadcast %152 : f32 to vector<1x2x128xf32>
    %154 = arith.mulf %151, %153 : vector<1x2x128xf32>
    %155 = arith.addf %121, %154 : vector<1x2x128xf32>
    %c16 = arith.constant 16 : index
    %156 = memref.load %arg5[%c16] : memref<32xf32, #tpu.memory_space<smem>>
    %157 = vector.broadcast %156 : f32 to vector<1x2x128xf32>
    %158 = arith.mulf %7, %157 : vector<1x2x128xf32>
    %c17 = arith.constant 17 : index
    %159 = memref.load %arg5[%c17] : memref<32xf32, #tpu.memory_space<smem>>
    %160 = vector.broadcast %159 : f32 to vector<1x2x128xf32>
    %161 = arith.mulf %10, %160 : vector<1x2x128xf32>
    %162 = arith.addf %158, %161 : vector<1x2x128xf32>
    %c18 = arith.constant 18 : index
    %163 = memref.load %arg5[%c18] : memref<32xf32, #tpu.memory_space<smem>>
    %164 = vector.broadcast %163 : f32 to vector<1x2x128xf32>
    %165 = arith.mulf %13, %164 : vector<1x2x128xf32>
    %166 = arith.addf %162, %165 : vector<1x2x128xf32>
    %c19 = arith.constant 19 : index
    %167 = memref.load %arg5[%c19] : memref<32xf32, #tpu.memory_space<smem>>
    %168 = vector.broadcast %167 : f32 to vector<1x2x128xf32>
    %169 = arith.mulf %16, %168 : vector<1x2x128xf32>
    %170 = arith.addf %166, %169 : vector<1x2x128xf32>
    %c8_52 = arith.constant 8 : index
    %171 = memref.load %arg7[%c8_52] : memref<16xf32, #tpu.memory_space<smem>>
    %172 = vector.broadcast %171 : f32 to vector<1x2x128xf32>
    %173 = arith.mulf %18, %172 : vector<1x2x128xf32>
    %174 = arith.addf %170, %173 : vector<1x2x128xf32>
    %c9_53 = arith.constant 9 : index
    %175 = memref.load %arg7[%c9_53] : memref<16xf32, #tpu.memory_space<smem>>
    %176 = vector.broadcast %175 : f32 to vector<1x2x128xf32>
    %177 = arith.mulf %20, %176 : vector<1x2x128xf32>
    %178 = arith.addf %174, %177 : vector<1x2x128xf32>
    %c4_54 = arith.constant 4 : index
    %179 = memref.load %arg6[%c4_54] : memref<8xf32, #tpu.memory_space<smem>>
    %c4_55 = arith.constant 4 : index
    %180 = memref.load %arg8[%c4_55] : memref<8xf32, #tpu.memory_space<smem>>
    %181 = arith.addf %179, %180 : f32
    %182 = vector.broadcast %181 : f32 to vector<1x2x128xf32>
    %183 = arith.addf %178, %182 : vector<1x2x128xf32>
    %cst_56 = arith.constant 0.000000e+00 : f32
    %184 = vector.broadcast %cst_56 : f32 to vector<1x2x128xf32>
    %185 = arith.maximumf %183, %184 : vector<1x2x128xf32>
    %c4_57 = arith.constant 4 : index
    %186 = memref.load %arg9[%c4_57] : memref<8xf32, #tpu.memory_space<smem>>
    %187 = vector.broadcast %186 : f32 to vector<1x2x128xf32>
    %188 = arith.mulf %185, %187 : vector<1x2x128xf32>
    %189 = arith.addf %155, %188 : vector<1x2x128xf32>
    %c20 = arith.constant 20 : index
    %190 = memref.load %arg5[%c20] : memref<32xf32, #tpu.memory_space<smem>>
    %191 = vector.broadcast %190 : f32 to vector<1x2x128xf32>
    %192 = arith.mulf %7, %191 : vector<1x2x128xf32>
    %c21 = arith.constant 21 : index
    %193 = memref.load %arg5[%c21] : memref<32xf32, #tpu.memory_space<smem>>
    %194 = vector.broadcast %193 : f32 to vector<1x2x128xf32>
    %195 = arith.mulf %10, %194 : vector<1x2x128xf32>
    %196 = arith.addf %192, %195 : vector<1x2x128xf32>
    %c22 = arith.constant 22 : index
    %197 = memref.load %arg5[%c22] : memref<32xf32, #tpu.memory_space<smem>>
    %198 = vector.broadcast %197 : f32 to vector<1x2x128xf32>
    %199 = arith.mulf %13, %198 : vector<1x2x128xf32>
    %200 = arith.addf %196, %199 : vector<1x2x128xf32>
    %c23 = arith.constant 23 : index
    %201 = memref.load %arg5[%c23] : memref<32xf32, #tpu.memory_space<smem>>
    %202 = vector.broadcast %201 : f32 to vector<1x2x128xf32>
    %203 = arith.mulf %16, %202 : vector<1x2x128xf32>
    %204 = arith.addf %200, %203 : vector<1x2x128xf32>
    %c10_58 = arith.constant 10 : index
    %205 = memref.load %arg7[%c10_58] : memref<16xf32, #tpu.memory_space<smem>>
    %206 = vector.broadcast %205 : f32 to vector<1x2x128xf32>
    %207 = arith.mulf %18, %206 : vector<1x2x128xf32>
    %208 = arith.addf %204, %207 : vector<1x2x128xf32>
    %c11_59 = arith.constant 11 : index
    %209 = memref.load %arg7[%c11_59] : memref<16xf32, #tpu.memory_space<smem>>
    %210 = vector.broadcast %209 : f32 to vector<1x2x128xf32>
    %211 = arith.mulf %20, %210 : vector<1x2x128xf32>
    %212 = arith.addf %208, %211 : vector<1x2x128xf32>
    %c5_60 = arith.constant 5 : index
    %213 = memref.load %arg6[%c5_60] : memref<8xf32, #tpu.memory_space<smem>>
    %c5_61 = arith.constant 5 : index
    %214 = memref.load %arg8[%c5_61] : memref<8xf32, #tpu.memory_space<smem>>
    %215 = arith.addf %213, %214 : f32
    %216 = vector.broadcast %215 : f32 to vector<1x2x128xf32>
    %217 = arith.addf %212, %216 : vector<1x2x128xf32>
    %cst_62 = arith.constant 0.000000e+00 : f32
    %218 = vector.broadcast %cst_62 : f32 to vector<1x2x128xf32>
    %219 = arith.maximumf %217, %218 : vector<1x2x128xf32>
    %c5_63 = arith.constant 5 : index
    %220 = memref.load %arg9[%c5_63] : memref<8xf32, #tpu.memory_space<smem>>
    %221 = vector.broadcast %220 : f32 to vector<1x2x128xf32>
    %222 = arith.mulf %219, %221 : vector<1x2x128xf32>
    %223 = arith.addf %189, %222 : vector<1x2x128xf32>
    %c24 = arith.constant 24 : index
    %224 = memref.load %arg5[%c24] : memref<32xf32, #tpu.memory_space<smem>>
    %225 = vector.broadcast %224 : f32 to vector<1x2x128xf32>
    %226 = arith.mulf %7, %225 : vector<1x2x128xf32>
    %c25 = arith.constant 25 : index
    %227 = memref.load %arg5[%c25] : memref<32xf32, #tpu.memory_space<smem>>
    %228 = vector.broadcast %227 : f32 to vector<1x2x128xf32>
    %229 = arith.mulf %10, %228 : vector<1x2x128xf32>
    %230 = arith.addf %226, %229 : vector<1x2x128xf32>
    %c26 = arith.constant 26 : index
    %231 = memref.load %arg5[%c26] : memref<32xf32, #tpu.memory_space<smem>>
    %232 = vector.broadcast %231 : f32 to vector<1x2x128xf32>
    %233 = arith.mulf %13, %232 : vector<1x2x128xf32>
    %234 = arith.addf %230, %233 : vector<1x2x128xf32>
    %c27 = arith.constant 27 : index
    %235 = memref.load %arg5[%c27] : memref<32xf32, #tpu.memory_space<smem>>
    %236 = vector.broadcast %235 : f32 to vector<1x2x128xf32>
    %237 = arith.mulf %16, %236 : vector<1x2x128xf32>
    %238 = arith.addf %234, %237 : vector<1x2x128xf32>
    %c12_64 = arith.constant 12 : index
    %239 = memref.load %arg7[%c12_64] : memref<16xf32, #tpu.memory_space<smem>>
    %240 = vector.broadcast %239 : f32 to vector<1x2x128xf32>
    %241 = arith.mulf %18, %240 : vector<1x2x128xf32>
    %242 = arith.addf %238, %241 : vector<1x2x128xf32>
    %c13_65 = arith.constant 13 : index
    %243 = memref.load %arg7[%c13_65] : memref<16xf32, #tpu.memory_space<smem>>
    %244 = vector.broadcast %243 : f32 to vector<1x2x128xf32>
    %245 = arith.mulf %20, %244 : vector<1x2x128xf32>
    %246 = arith.addf %242, %245 : vector<1x2x128xf32>
    %c6_66 = arith.constant 6 : index
    %247 = memref.load %arg6[%c6_66] : memref<8xf32, #tpu.memory_space<smem>>
    %c6_67 = arith.constant 6 : index
    %248 = memref.load %arg8[%c6_67] : memref<8xf32, #tpu.memory_space<smem>>
    %249 = arith.addf %247, %248 : f32
    %250 = vector.broadcast %249 : f32 to vector<1x2x128xf32>
    %251 = arith.addf %246, %250 : vector<1x2x128xf32>
    %cst_68 = arith.constant 0.000000e+00 : f32
    %252 = vector.broadcast %cst_68 : f32 to vector<1x2x128xf32>
    %253 = arith.maximumf %251, %252 : vector<1x2x128xf32>
    %c6_69 = arith.constant 6 : index
    %254 = memref.load %arg9[%c6_69] : memref<8xf32, #tpu.memory_space<smem>>
    %255 = vector.broadcast %254 : f32 to vector<1x2x128xf32>
    %256 = arith.mulf %253, %255 : vector<1x2x128xf32>
    %257 = arith.addf %223, %256 : vector<1x2x128xf32>
    %c28 = arith.constant 28 : index
    %258 = memref.load %arg5[%c28] : memref<32xf32, #tpu.memory_space<smem>>
    %259 = vector.broadcast %258 : f32 to vector<1x2x128xf32>
    %260 = arith.mulf %7, %259 : vector<1x2x128xf32>
    %c29 = arith.constant 29 : index
    %261 = memref.load %arg5[%c29] : memref<32xf32, #tpu.memory_space<smem>>
    %262 = vector.broadcast %261 : f32 to vector<1x2x128xf32>
    %263 = arith.mulf %10, %262 : vector<1x2x128xf32>
    %264 = arith.addf %260, %263 : vector<1x2x128xf32>
    %c30 = arith.constant 30 : index
    %265 = memref.load %arg5[%c30] : memref<32xf32, #tpu.memory_space<smem>>
    %266 = vector.broadcast %265 : f32 to vector<1x2x128xf32>
    %267 = arith.mulf %13, %266 : vector<1x2x128xf32>
    %268 = arith.addf %264, %267 : vector<1x2x128xf32>
    %c31 = arith.constant 31 : index
    %269 = memref.load %arg5[%c31] : memref<32xf32, #tpu.memory_space<smem>>
    %270 = vector.broadcast %269 : f32 to vector<1x2x128xf32>
    %271 = arith.mulf %16, %270 : vector<1x2x128xf32>
    %272 = arith.addf %268, %271 : vector<1x2x128xf32>
    %c14_70 = arith.constant 14 : index
    %273 = memref.load %arg7[%c14_70] : memref<16xf32, #tpu.memory_space<smem>>
    %274 = vector.broadcast %273 : f32 to vector<1x2x128xf32>
    %275 = arith.mulf %18, %274 : vector<1x2x128xf32>
    %276 = arith.addf %272, %275 : vector<1x2x128xf32>
    %c15_71 = arith.constant 15 : index
    %277 = memref.load %arg7[%c15_71] : memref<16xf32, #tpu.memory_space<smem>>
    %278 = vector.broadcast %277 : f32 to vector<1x2x128xf32>
    %279 = arith.mulf %20, %278 : vector<1x2x128xf32>
    %280 = arith.addf %276, %279 : vector<1x2x128xf32>
    %c7_72 = arith.constant 7 : index
    %281 = memref.load %arg6[%c7_72] : memref<8xf32, #tpu.memory_space<smem>>
    %c7_73 = arith.constant 7 : index
    %282 = memref.load %arg8[%c7_73] : memref<8xf32, #tpu.memory_space<smem>>
    %283 = arith.addf %281, %282 : f32
    %284 = vector.broadcast %283 : f32 to vector<1x2x128xf32>
    %285 = arith.addf %280, %284 : vector<1x2x128xf32>
    %cst_74 = arith.constant 0.000000e+00 : f32
    %286 = vector.broadcast %cst_74 : f32 to vector<1x2x128xf32>
    %287 = arith.maximumf %285, %286 : vector<1x2x128xf32>
    %c7_75 = arith.constant 7 : index
    %288 = memref.load %arg9[%c7_75] : memref<8xf32, #tpu.memory_space<smem>>
    %289 = vector.broadcast %288 : f32 to vector<1x2x128xf32>
    %290 = arith.mulf %287, %289 : vector<1x2x128xf32>
    %291 = arith.addf %257, %290 : vector<1x2x128xf32>
    %c0_76 = arith.constant 0 : index
    %292 = memref.load %arg10[%c0_76] : memref<1xf32, #tpu.memory_space<smem>>
    %293 = vector.broadcast %292 : f32 to vector<1x2x128xf32>
    %294 = arith.addf %291, %293 : vector<1x2x128xf32>
    %cst_77 = arith.constant 0.000000e+00 : f32
    %295 = vector.broadcast %cst_77 : f32 to vector<1x2x128xf32>
    %296 = arith.subf %295, %294 : vector<1x2x128xf32>
    %297 = math.exp %296 : vector<1x2x128xf32>
    %cst_78 = arith.constant 1.000000e+00 : f32
    %298 = vector.broadcast %cst_78 : f32 to vector<1x2x128xf32>
    %299 = arith.addf %298, %297 : vector<1x2x128xf32>
    %cst_79 = arith.constant 1.000000e+00 : f32
    %300 = vector.broadcast %cst_79 : f32 to vector<1x2x128xf32>
    %301 = arith.divf %300, %299 : vector<1x2x128xf32>
    %302 = arith.mulf %7, %301 : vector<1x2x128xf32>
    %c0_80 = arith.constant 0 : index
    %c0_81 = arith.constant 0 : index
    %c0_82 = arith.constant 0 : index
    %c0_83 = arith.constant 0 : index
    %303 = vector.load %arg11[%c0_80, %c0_81, %c0_82, %c0_83] : memref<1x4x2x128xf32, #tpu.memory_space<vmem>>, vector<1x1x2x128xf32>
    %304 = vector.shape_cast %303 : vector<1x1x2x128xf32> to vector<1x2x128xf32>
    %305 = vector.shape_cast %302 : vector<1x2x128xf32> to vector<1x1x2x128xf32>
    tpu.vector_store %arg11[%c0_80, %c0_81, %c0_82, %c0_83], %305 {strides = array<i32>} : memref<1x4x2x128xf32, #tpu.memory_space<vmem>>, vector<1x1x2x128xf32>,
    %306 = arith.mulf %10, %301 : vector<1x2x128xf32>
    %c0_84 = arith.constant 0 : index
    %c1_85 = arith.constant 1 : index
    %c0_86 = arith.constant 0 : index
    %c0_87 = arith.constant 0 : index
    %307 = vector.load %arg11[%c0_84, %c1_85, %c0_86, %c0_87] : memref<1x4x2x128xf32, #tpu.memory_space<vmem>>, vector<1x1x2x128xf32>
    %308 = vector.shape_cast %307 : vector<1x1x2x128xf32> to vector<1x2x128xf32>
    %309 = vector.shape_cast %306 : vector<1x2x128xf32> to vector<1x1x2x128xf32>
    tpu.vector_store %arg11[%c0_84, %c1_85, %c0_86, %c0_87], %309 {strides = array<i32>} : memref<1x4x2x128xf32, #tpu.memory_space<vmem>>, vector<1x1x2x128xf32>,
    %310 = arith.mulf %13, %301 : vector<1x2x128xf32>
    %c0_88 = arith.constant 0 : index
    %c2_89 = arith.constant 2 : index
    %c0_90 = arith.constant 0 : index
    %c0_91 = arith.constant 0 : index
    %311 = vector.load %arg11[%c0_88, %c2_89, %c0_90, %c0_91] : memref<1x4x2x128xf32, #tpu.memory_space<vmem>>, vector<1x1x2x128xf32>
    %312 = vector.shape_cast %311 : vector<1x1x2x128xf32> to vector<1x2x128xf32>
    %313 = vector.shape_cast %310 : vector<1x2x128xf32> to vector<1x1x2x128xf32>
    tpu.vector_store %arg11[%c0_88, %c2_89, %c0_90, %c0_91], %313 {strides = array<i32>} : memref<1x4x2x128xf32, #tpu.memory_space<vmem>>, vector<1x1x2x128xf32>,
    %314 = arith.mulf %16, %301 : vector<1x2x128xf32>
    %c0_92 = arith.constant 0 : index
    %c3_93 = arith.constant 3 : index
    %c0_94 = arith.constant 0 : index
    %c0_95 = arith.constant 0 : index
    %315 = vector.load %arg11[%c0_92, %c3_93, %c0_94, %c0_95] : memref<1x4x2x128xf32, #tpu.memory_space<vmem>>, vector<1x1x2x128xf32>
    %316 = vector.shape_cast %315 : vector<1x1x2x128xf32> to vector<1x2x128xf32>
    %317 = vector.shape_cast %314 : vector<1x2x128xf32> to vector<1x1x2x128xf32>
    tpu.vector_store %arg11[%c0_92, %c3_93, %c0_94, %c0_95], %317 {strides = array<i32>} : memref<1x4x2x128xf32, #tpu.memory_space<vmem>>, vector<1x1x2x128xf32>,
    return
  }
  func.func @transform_0(%arg0: i32, %arg1: i32) -> (i32, i32, i32, i32) {
    %c0_i32 = arith.constant 0 : i32
    %c0_i32_0 = arith.constant 0 : i32
    %c0_i32_1 = arith.constant 0 : i32
    return %arg0, %c0_i32, %arg1, %c0_i32_0 : i32, i32, i32, i32
  }
  func.func @transform_1(%arg0: i32, %arg1: i32) -> (i32, i32, i32, i32) {
    %c0_i32 = arith.constant 0 : i32
    %c0_i32_0 = arith.constant 0 : i32
    %c0_i32_1 = arith.constant 0 : i32
    return %arg0, %c0_i32, %arg1, %c0_i32_0 : i32, i32, i32, i32
  }
  func.func @transform_2(%arg0: i32, %arg1: i32) -> (i32, i32, i32, i32) {
    %c0_i32 = arith.constant 0 : i32
    %c0_i32_0 = arith.constant 0 : i32
    %c0_i32_1 = arith.constant 0 : i32
    return %arg0, %c0_i32, %arg1, %c0_i32_0 : i32, i32, i32, i32
  }
  func.func @transform_3(%arg0: i32, %arg1: i32) -> i32 {
    %c0_i32 = arith.constant 0 : i32
    %c0_i32_0 = arith.constant 0 : i32
    return %c0_i32 : i32
  }
  func.func @transform_4(%arg0: i32, %arg1: i32) -> i32 {
    %c0_i32 = arith.constant 0 : i32
    %c0_i32_0 = arith.constant 0 : i32
    return %c0_i32 : i32
  }
  func.func @transform_5(%arg0: i32, %arg1: i32) -> i32 {
    %c0_i32 = arith.constant 0 : i32
    %c0_i32_0 = arith.constant 0 : i32
    return %c0_i32 : i32
  }
  func.func @transform_6(%arg0: i32, %arg1: i32) -> i32 {
    %c0_i32 = arith.constant 0 : i32
    %c0_i32_0 = arith.constant 0 : i32
    return %c0_i32 : i32
  }
  func.func @transform_7(%arg0: i32, %arg1: i32) -> i32 {
    %c0_i32 = arith.constant 0 : i32
    %c0_i32_0 = arith.constant 0 : i32
    return %c0_i32 : i32
  }
  func.func @transform_8(%arg0: i32, %arg1: i32) -> i32 {
    %c0_i32 = arith.constant 0 : i32
    %c0_i32_0 = arith.constant 0 : i32
    return %c0_i32 : i32
  }
  func.func @transform_9(%arg0: i32, %arg1: i32) -> (i32, i32, i32, i32) {
    %c0_i32 = arith.constant 0 : i32
    %c0_i32_0 = arith.constant 0 : i32
    %c0_i32_1 = arith.constant 0 : i32
    return %arg0, %c0_i32, %arg1, %c0_i32_0 : i32, i32, i32, i32
  }
}

</mosaic_0001>

<llo_original>
// kernel: tpu_custom_call.1
$region0: #{tpu_custom_call.1}
  #allocation0 [shape = 'u32[]', space=smem, size = 0x4, offset = 0x4, fixed_abs, tag = 'smem constant byte address 0x4 - core index']
  #allocation1 [shape = 'u32[72,128]{1,0:T(1,128)}', space=vmem, size = 0x9000, scoped, tag = 'internal scratch']
  #allocation2 [shape = 'f32[1]{0:T(128)S(6)}', space=smem, size = 0x200, scoped, tag = 'scoped memory for tpu_custom_call.1']
  %s0 = inlined_call_operand.hbm [shape: f32[2,4,2,128], index: 0, kind: input, shape index: {}]
  %s1 = inlined_call_operand.hbm [shape: f32[2,2,2,128], index: 1, kind: input, shape index: {}]
  %s2 = inlined_call_operand.hbm [shape: f32[2,1,2,128], index: 2, kind: input, shape index: {}]
  %s3 = inlined_call_operand.vmem [shape: f32[32], index: 3, kind: input, shape index: {}]
  %s4 = inlined_call_operand.vmem [shape: f32[8], index: 4, kind: input, shape index: {}]
  %s5 = inlined_call_operand.vmem [shape: f32[16], index: 5, kind: input, shape index: {}]
  %s6 = inlined_call_operand.vmem [shape: f32[8], index: 6, kind: input, shape index: {}]
  %s7 = inlined_call_operand.vmem [shape: f32[8], index: 7, kind: input, shape index: {}]
  %s8 = inlined_call_operand.<no memory space> [shape: f32[1], index: 8, kind: input, shape index: {}]
  %s9 = inlined_call_operand.hbm [shape: f32[2,4,2,128], index: 9, kind: output, shape index: {}]
  %s10 = sld [smem:[#allocation0]]
  $region101: #{tpu_custom_call.1} parent=0
    _
  %s12 = ssub.s32 1, %s10
  %s13 = scalar_select 0, %s12, %s10
  %14 = sst [smem:[#allocation2]] %s8
  $region1: #{tpu_custom_call.1} parent=0
    #allocation3 [shape = 'u8[8192]{0}', space=vmem, size = 0x2000, scoped, tag = 'input window, operand 0']
    #allocation4 [shape = 's32[2]{0}', space=sflag, size = 0x8, scoped, tag = 'scoped memory for tpu_custom_call.1']
    #allocation5 [shape = 's32[2]{0}', space=sflag, size = 0x8, scoped, tag = 'scoped memory for tpu_custom_call.1']
    #allocation6 [shape = 's32[2]{0}', space=sflag, size = 0x8, scoped, tag = 'scoped memory for tpu_custom_call.1']
    #allocation7 [shape = 'u8[4096]{0}', space=vmem, size = 0x1000, scoped, tag = 'input window, operand 1']
    #allocation8 [shape = 's32[2]{0}', space=sflag, size = 0x8, scoped, tag = 'scoped memory for tpu_custom_call.1']
    #allocation9 [shape = 'u8[2048]{0}', space=vmem, size = 0x800, scoped, tag = 'input window, operand 2']
    #allocation10 [shape = 'u8[512]{0}', space=smem, size = 0x200, scoped, tag = 'input window, operand 3, single buffered']
    #allocation11 [shape = 'u8[512]{0}', space=smem, size = 0x200, scoped, tag = 'input window, operand 4, single buffered']
    #allocation12 [shape = 's32[1]{0}', space=sflag, size = 0x4, scoped, tag = 'scoped memory for tpu_custom_call.1']
    #allocation13 [shape = 'u8[512]{0}', space=smem, size = 0x200, scoped, tag = 'input window, operand 5, single buffered']
    #allocation14 [shape = 'u8[512]{0}', space=smem, size = 0x200, scoped, tag = 'input window, operand 6, single buffered']
    #allocation15 [shape = 's32[1]{0}', space=sflag, size = 0x4, scoped, tag = 'scoped memory for tpu_custom_call.1']
    #allocation16 [shape = 'u8[512]{0}', space=smem, size = 0x200, scoped, tag = 'input window, operand 7, single buffered']
    #allocation17 [shape = 'u8[8192]{0}', space=vmem, size = 0x2000, scoped, tag = 'output window, operand 0']
    %15 = vsyncpa [#allocation4], 0
    %s16 = scalar_lea.sflag [#allocation4], 1
    %17 = vsyncpa %s16, 0
    %18 = vsyncpa [#allocation8], 0
    %s19 = scalar_lea.sflag [#allocation8], 1
    %20 = vsyncpa %s19, 0
    %21 = vsyncpa [#allocation6], 0
    %22 = vsyncpa [#allocation12], 0
    %23 = vsyncpa [#allocation15], 0
    %24 = vsyncpa [#allocation5], 0
    %s25 = scalar_lea.sflag [#allocation5], 1
    %26 = vsyncpa %s25, 0
    loop: start=0, step=1, limit=4
    $region2: #{tpu_custom_call.1} parent=1 // loop_pre_header
      _
    $region3: #{tpu_custom_call.1} parent=1 // loop_header
      %s28 = sphi 0, %s32
      %p29 = scmp.ge.s32.totalorder %s28, 4
      %s35 = sphi 0, %s47
      %s36 = sphi 0, %s43
      %s37 = sphi 0, %s35
      %s38 = sphi 0, %s36
      %s39 = sphi 0, %s37
      %s40 = sphi 0, %s38
      %s52 = sphi 0, %s54
      %s55 = sphi 0, %s52
      %s56 = sphi 0, %s55
      %s72 = sphi 0, %s56
      %s80 = sphi 0, %s82
      %s83 = sphi 0, %s80
      %s84 = sphi 0, %s83
      %s100 = sphi 0, %s84
      %s108 = sphi 0, %s110
      %s111 = sphi 0, %s108
      %s112 = sphi 0, %s111
      %s128 = sphi 0, %s112
      %s132 = sphi 0, %s132
      %s134 = sphi 0, %s132
      %s135 = sphi 0, %s134
      %s149 = sphi 0, %s135
      %s153 = sphi 0, %s153
      %s155 = sphi 0, %s153
      %s156 = sphi 0, %s155
      %s170 = sphi 0, %s156
      %s174 = sphi 0, %s174
      %s176 = sphi 0, %s174
      %s177 = sphi 0, %s176
      %s191 = sphi 0, %s177
      %s195 = sphi 0, %s195
      %s197 = sphi 0, %s195
      %s198 = sphi 0, %s197
      %s212 = sphi 0, %s198
      %s216 = sphi 0, %s216
      %s218 = sphi 0, %s216
      %s219 = sphi 0, %s218
      %s233 = sphi 0, %s219
      %s237 = sphi 0, %s237
      %s239 = sphi 0, %s237
      %s240 = sphi 0, %s239
      %s254 = sphi 0, %s240
      %s262 = sphi 0, %s264
      %s265 = sphi 0, %s262
      %s266 = sphi 0, %s265
      %s282 = sphi 0, %s266
    $region4: #{tpu_custom_call.1} parent=1 // loop_header_branch
      %31 = sbr.rel (%p29) target = $region8
    $region5: #{tpu_custom_call.1} parent=1 // loop_body
      %s33 = ssub.s32 %s28, 1
      %s34 = ssub.s32 %s28, 2
      %s41 = sadd.s32 1, %s36
      %p42 = scmp.ge.s32.totalorder %s41, 1
      %s43 = scalar_select %p42, 0, %s41
      %s44 = sadd.s32 1, %s35
      %s45 = scalar_select %p42, %s44, %s35
      %p46 = scmp.ge.s32.totalorder %s45, 2
      %s47 = scalar_select %p46, 0, %s45
      %s48 = ssub.s32 %s35, %s47
      %s49 = ssub.s32 %s36, %s43
      %s50 = sor.u32 %s48, %s49
      %p51 = scmp.eq.s32.totalorder %s50, 0
      %s53 = sadd.s32 %s52, 1
      %s54 = scalar_select %p51, %s52, %s53
      %p57 = pneg %p51
      %p58 = scmp.eq.s32.totalorder %s28, 1
      %p59 = por %p57, %p58
      %p60 = scmp.ne.s32.totalorder %s52, %s55
      %p61 = scmp.eq.s32.totalorder %s28, 0
      %p62 = por %p60, %p61
      %p63 = scmp.ne.s32.totalorder %s52, %s55
      %p64 = scmp.eq.s32.totalorder %s33, 1
      %p65 = por %p63, %p64
      %p66 = scmp.ne.s32.totalorder %s55, %s56
      %p67 = scmp.eq.s32.totalorder %s33, 0
      %p68 = por %p66, %p67
      %p69 = scmp.ne.s32.totalorder %s55, %s56
      %p70 = scmp.eq.s32.totalorder %s34, 1
      %p71 = por %p69, %p70
      %p73 = scmp.ne.s32.totalorder %s56, %s72
      %p74 = scmp.eq.s32.totalorder %s34, 0
      %p75 = por %p73, %p74
      %s76 = ssub.s32 %s35, %s47
      %s77 = ssub.s32 %s36, %s43
      %s78 = sor.u32 %s76, %s77
      %p79 = scmp.eq.s32.totalorder %s78, 0
      %s81 = sadd.s32 %s80, 1
      %s82 = scalar_select %p79, %s80, %s81
      %p85 = pneg %p79
      %p86 = scmp.eq.s32.totalorder %s28, 1
      %p87 = por %p85, %p86
      %p88 = scmp.ne.s32.totalorder %s80, %s83
      %p89 = scmp.eq.s32.totalorder %s28, 0
      %p90 = por %p88, %p89
      %p91 = scmp.ne.s32.totalorder %s80, %s83
      %p92 = scmp.eq.s32.totalorder %s33, 1
      %p93 = por %p91, %p92
      %p94 = scmp.ne.s32.totalorder %s83, %s84
      %p95 = scmp.eq.s32.totalorder %s33, 0
      %p96 = por %p94, %p95
      %p97 = scmp.ne.s32.totalorder %s83, %s84
      %p98 = scmp.eq.s32.totalorder %s34, 1
      %p99 = por %p97, %p98
      %p101 = scmp.ne.s32.totalorder %s84, %s100
      %p102 = scmp.eq.s32.totalorder %s34, 0
      %p103 = por %p101, %p102
      %s104 = ssub.s32 %s35, %s47
      %s105 = ssub.s32 %s36, %s43
      %s106 = sor.u32 %s104, %s105
      %p107 = scmp.eq.s32.totalorder %s106, 0
      %s109 = sadd.s32 %s108, 1
      %s110 = scalar_select %p107, %s108, %s109
      %p113 = pneg %p107
      %p114 = scmp.eq.s32.totalorder %s28, 1
      %p115 = por %p113, %p114
      %p116 = scmp.ne.s32.totalorder %s108, %s111
      %p117 = scmp.eq.s32.totalorder %s28, 0
      %p118 = por %p116, %p117
      %p119 = scmp.ne.s32.totalorder %s108, %s111
      %p120 = scmp.eq.s32.totalorder %s33, 1
      %p121 = por %p119, %p120
      %p122 = scmp.ne.s32.totalorder %s111, %s112
      %p123 = scmp.eq.s32.totalorder %s33, 0
      %p124 = por %p122, %p123
      %p125 = scmp.ne.s32.totalorder %s111, %s112
      %p126 = scmp.eq.s32.totalorder %s34, 1
      %p127 = por %p125, %p126
      %p129 = scmp.ne.s32.totalorder %s112, %s128
      %p130 = scmp.eq.s32.totalorder %s34, 0
      %p131 = por %p129, %p130
      %s133 = sadd.s32 %s132, 1
      %p136 = scmp.eq.s32.totalorder %s28, 1
      %p137 = scmp.ne.s32.totalorder %s132, %s134
      %p138 = scmp.eq.s32.totalorder %s28, 0
      %p139 = por %p137, %p138
      %p140 = scmp.ne.s32.totalorder %s132, %s134
      %p141 = scmp.eq.s32.totalorder %s33, 1
      %p142 = por %p140, %p141
      %p143 = scmp.ne.s32.totalorder %s134, %s135
      %p144 = scmp.eq.s32.totalorder %s33, 0
      %p145 = por %p143, %p144
      %p146 = scmp.ne.s32.totalorder %s134, %s135
      %p147 = scmp.eq.s32.totalorder %s34, 1
      %p148 = por %p146, %p147
      %p150 = scmp.ne.s32.totalorder %s135, %s149
      %p151 = scmp.eq.s32.totalorder %s34, 0
      %p152 = por %p150, %p151
      %s154 = sadd.s32 %s153, 1
      %p157 = scmp.eq.s32.totalorder %s28, 1
      %p158 = scmp.ne.s32.totalorder %s153, %s155
      %p159 = scmp.eq.s32.totalorder %s28, 0
      %p160 = por %p158, %p159
      %p161 = scmp.ne.s32.totalorder %s153, %s155
      %p162 = scmp.eq.s32.totalorder %s33, 1
      %p163 = por %p161, %p162
      %p164 = scmp.ne.s32.totalorder %s155, %s156
      %p165 = scmp.eq.s32.totalorder %s33, 0
      %p166 = por %p164, %p165
      %p167 = scmp.ne.s32.totalorder %s155, %s156
      %p168 = scmp.eq.s32.totalorder %s34, 1
      %p169 = por %p167, %p168
      %p171 = scmp.ne.s32.totalorder %s156, %s170
      %p172 = scmp.eq.s32.totalorder %s34, 0
      %p173 = por %p171, %p172
      %s175 = sadd.s32 %s174, 1
      %p178 = scmp.eq.s32.totalorder %s28, 1
      %p179 = scmp.ne.s32.totalorder %s174, %s176
      %p180 = scmp.eq.s32.totalorder %s28, 0
      %p181 = por %p179, %p180
      %p182 = scmp.ne.s32.totalorder %s174, %s176
      %p183 = scmp.eq.s32.totalorder %s33, 1
      %p184 = por %p182, %p183
      %p185 = scmp.ne.s32.totalorder %s176, %s177
      %p186 = scmp.eq.s32.totalorder %s33, 0
      %p187 = por %p185, %p186
      %p188 = scmp.ne.s32.totalorder %s176, %s177
      %p189 = scmp.eq.s32.totalorder %s34, 1
      %p190 = por %p188, %p189
      %p192 = scmp.ne.s32.totalorder %s177, %s191
      %p193 = scmp.eq.s32.totalorder %s34, 0
      %p194 = por %p192, %p193
      %s196 = sadd.s32 %s195, 1
      %p199 = scmp.eq.s32.totalorder %s28, 1
      %p200 = scmp.ne.s32.totalorder %s195, %s197
      %p201 = scmp.eq.s32.totalorder %s28, 0
      %p202 = por %p200, %p201
      %p203 = scmp.ne.s32.totalorder %s195, %s197
      %p204 = scmp.eq.s32.totalorder %s33, 1
      %p205 = por %p203, %p204
      %p206 = scmp.ne.s32.totalorder %s197, %s198
      %p207 = scmp.eq.s32.totalorder %s33, 0
      %p208 = por %p206, %p207
      %p209 = scmp.ne.s32.totalorder %s197, %s198
      %p210 = scmp.eq.s32.totalorder %s34, 1
      %p211 = por %p209, %p210
      %p213 = scmp.ne.s32.totalorder %s198, %s212
      %p214 = scmp.eq.s32.totalorder %s34, 0
      %p215 = por %p213, %p214
      %s217 = sadd.s32 %s216, 1
      %p220 = scmp.eq.s32.totalorder %s28, 1
      %p221 = scmp.ne.s32.totalorder %s216, %s218
      %p222 = scmp.eq.s32.totalorder %s28, 0
      %p223 = por %p221, %p222
      %p224 = scmp.ne.s32.totalorder %s216, %s218
      %p225 = scmp.eq.s32.totalorder %s33, 1
      %p226 = por %p224, %p225
      %p227 = scmp.ne.s32.totalorder %s218, %s219
      %p228 = scmp.eq.s32.totalorder %s33, 0
      %p229 = por %p227, %p228
      %p230 = scmp.ne.s32.totalorder %s218, %s219
      %p231 = scmp.eq.s32.totalorder %s34, 1
      %p232 = por %p230, %p231
      %p234 = scmp.ne.s32.totalorder %s219, %s233
      %p235 = scmp.eq.s32.totalorder %s34, 0
      %p236 = por %p234, %p235
      %s238 = sadd.s32 %s237, 1
      %p241 = scmp.eq.s32.totalorder %s28, 1
      %p242 = scmp.ne.s32.totalorder %s237, %s239
      %p243 = scmp.eq.s32.totalorder %s28, 0
      %p244 = por %p242, %p243
      %p245 = scmp.ne.s32.totalorder %s237, %s239
      %p246 = scmp.eq.s32.totalorder %s33, 1
      %p247 = por %p245, %p246
      %p248 = scmp.ne.s32.totalorder %s239, %s240
      %p249 = scmp.eq.s32.totalorder %s33, 0
      %p250 = por %p248, %p249
      %p251 = scmp.ne.s32.totalorder %s239, %s240
      %p252 = scmp.eq.s32.totalorder %s34, 1
      %p253 = por %p251, %p252
      %p255 = scmp.ne.s32.totalorder %s240, %s254
      %p256 = scmp.eq.s32.totalorder %s34, 0
      %p257 = por %p255, %p256
      %s258 = ssub.s32 %s35, %s47
      %s259 = ssub.s32 %s36, %s43
      %s260 = sor.u32 %s258, %s259
      %p261 = scmp.eq.s32.totalorder %s260, 0
      %s263 = sadd.s32 %s262, 1
      %s264 = scalar_select %p261, %s262, %s263
      %p267 = pneg %p261
      %p268 = scmp.eq.s32.totalorder %s28, 1
      %p269 = por %p267, %p268
      %p270 = scmp.ne.s32.totalorder %s262, %s265
      %p271 = scmp.eq.s32.totalorder %s28, 0
      %p272 = por %p270, %p271
      %p273 = scmp.ne.s32.totalorder %s262, %s265
      %p274 = scmp.eq.s32.totalorder %s33, 1
      %p275 = por %p273, %p274
      %p276 = scmp.ne.s32.totalorder %s265, %s266
      %p277 = scmp.eq.s32.totalorder %s33, 0
      %p278 = por %p276, %p277
      %p279 = scmp.ne.s32.totalorder %s265, %s266
      %p280 = scmp.eq.s32.totalorder %s34, 1
      %p281 = por %p279, %p280
      %p283 = scmp.ne.s32.totalorder %s266, %s282
      %p284 = scmp.eq.s32.totalorder %s34, 0
      %p285 = por %p283, %p284
      %p286 = scmp.le.s32.totalorder 1, %s28
      %p287 = scmp.lt.s32.totalorder %s28, 3
      %p288 = pnand %p286, %p287
      %p289 = pneg %p288
      // Predicated region
      $region9: #{tpu_custom_call.1} parent=5 // pred_check
        _
      $region10: #{tpu_custom_call.1} parent=5 // pred_check_branch
        %291 = sbr.rel (%p288) target = $region12
      $region11: #{tpu_custom_call.1} parent=5 // pred_region
        %s292 = ssub.s32 %s28, 1
        // Predicated region
        $region13: #{tpu_custom_call.1} parent=11 // pred_check
          %p293 = pneg %p145
        $region14: #{tpu_custom_call.1} parent=11 // pred_check_branch
          %295 = sbr.rel (%p293) target = $region16
        $region15: #{tpu_custom_call.1} parent=11 // pred_region
          %297 = vsyncadd [#allocation6], 0
          %s299 = sshll.u32 %s3, 4
          %s300 = int_to_ptr.vmem [resolvable:$true] %s299
          %302 = dma.vmem_to_smem %s300, 16, [#allocation10], [#allocation6]
        $region16: #{tpu_custom_call.1} parent=11 // pred_fallthru
          _
        // Predicated region
        $region17: #{tpu_custom_call.1} parent=11 // pred_check
          %p303 = pneg %p166
        $region18: #{tpu_custom_call.1} parent=11 // pred_check_branch
          %305 = sbr.rel (%p303) target = $region20
        $region19: #{tpu_custom_call.1} parent=11 // pred_region
          %307 = vsyncadd [#allocation12], 0
          %s309 = sshll.u32 %s4, 4
          %s310 = int_to_ptr.vmem [resolvable:$true] %s309
          %312 = dma.vmem_to_smem %s310, 16, [#allocation11], [#allocation12]
        $region20: #{tpu_custom_call.1} parent=11 // pred_fallthru
          _
        // Predicated region
        $region21: #{tpu_custom_call.1} parent=11 // pred_check
          %p313 = pneg %p187
        $region22: #{tpu_custom_call.1} parent=11 // pred_check_branch
          %315 = sbr.rel (%p313) target = $region24
        $region23: #{tpu_custom_call.1} parent=11 // pred_region
          %317 = vsyncadd [#allocation12], 0
          %s319 = sshll.u32 %s5, 4
          %s320 = int_to_ptr.vmem [resolvable:$true] %s319
          %322 = dma.vmem_to_smem %s320, 16, [#allocation13], [#allocation12]
        $region24: #{tpu_custom_call.1} parent=11 // pred_fallthru
          _
        // Predicated region
        $region25: #{tpu_custom_call.1} parent=11 // pred_check
          %p323 = pneg %p208
        $region26: #{tpu_custom_call.1} parent=11 // pred_check_branch
          %325 = sbr.rel (%p323) target = $region28
        $region27: #{tpu_custom_call.1} parent=11 // pred_region
          %327 = vsyncadd [#allocation15], 0
          %s329 = sshll.u32 %s6, 4
          %s330 = int_to_ptr.vmem [resolvable:$true] %s329
          %332 = dma.vmem_to_smem %s330, 16, [#allocation14], [#allocation15]
        $region28: #{tpu_custom_call.1} parent=11 // pred_fallthru
          _
        // Predicated region
        $region29: #{tpu_custom_call.1} parent=11 // pred_check
          %p333 = pneg %p229
        $region30: #{tpu_custom_call.1} parent=11 // pred_check_branch
          %335 = sbr.rel (%p333) target = $region32
        $region31: #{tpu_custom_call.1} parent=11 // pred_region
          %337 = vsyncadd [#allocation15], 0
          %s339 = sshll.u32 %s7, 4
          %s340 = int_to_ptr.vmem [resolvable:$true] %s339
          %342 = dma.vmem_to_smem %s340, 16, [#allocation16], [#allocation15]
        $region32: #{tpu_custom_call.1} parent=11 // pred_fallthru
          _
        // Predicated region
        $region33: #{tpu_custom_call.1} parent=11 // pred_check
          %p343 = pneg %p250
        $region34: #{tpu_custom_call.1} parent=11 // pred_check_branch
          %345 = sbr.rel (%p343) target = $region36
        $region35: #{tpu_custom_call.1} parent=11 // pred_region
          _
        $region36: #{tpu_custom_call.1} parent=11 // pred_fallthru
          _
      $region12: #{tpu_custom_call.1} parent=5 // pred_fallthru
        _
      %p346 = scmp.lt.s32.totalorder %s28, 2
      // Predicated region
      $region37: #{tpu_custom_call.1} parent=5 // pred_check
        %p347 = pneg %p346
      $region38: #{tpu_custom_call.1} parent=5 // pred_check_branch
        %349 = sbr.rel (%p347) target = $region40
      $region39: #{tpu_custom_call.1} parent=5 // pred_region
        // Predicated region
        $region41: #{tpu_custom_call.1} parent=39 // pred_check
          %p350 = pneg %p62
        $region42: #{tpu_custom_call.1} parent=39 // pred_check_branch
          %352 = sbr.rel (%p350) target = $region44
        $region43: #{tpu_custom_call.1} parent=39 // pred_region
          %s353 = sand.u32 %s52, 1
          %s354 = scalar_lea.sflag [#allocation4], %s353
          %s355 = sand.u32 %s52, 1
          %s356 = smul.addr %s355, 8
          %s357 = scalar_lea.vmem [#allocation3], %s356
          %359 = vsyncadd %s354, 0
          %s360 = smul.addr %s35, 4
          %s361 = sadd.s32 %s36, %s360
          %s362 = smul.addr %s361, 2
          %s363 = scalar_lea.hbm %s0, %s362
          %s364 = sshll.u32 %s363, 4
          %s365 = int_to_ptr.hbm [resolvable:$true] %s364
          %s366 = sshll.u32 %s357, 4
          %s367 = int_to_ptr.vmem [resolvable:$true] %s366
          %372 = dma.hbm_to_vmem [thread:$0]  %s365, 128, %s367, %s354, 32, 32, 2
        $region44: #{tpu_custom_call.1} parent=39 // pred_fallthru
          _
        // Predicated region
        $region45: #{tpu_custom_call.1} parent=39 // pred_check
          %p373 = pneg %p90
        $region46: #{tpu_custom_call.1} parent=39 // pred_check_branch
          %375 = sbr.rel (%p373) target = $region48
        $region47: #{tpu_custom_call.1} parent=39 // pred_region
          %s376 = sand.u32 %s28, 1
          %s377 = scalar_lea.sflag [#allocation8], %s376
          %s378 = sand.u32 %s80, 1
          %s379 = smul.addr %s378, 4
          %s380 = scalar_lea.vmem [#allocation7], %s379
          %382 = vsyncadd %s377, 0
          %s383 = smul.addr %s35, 2
          %s384 = sadd.s32 %s36, %s383
          %s385 = smul.addr %s384, 2
          %s386 = scalar_lea.hbm %s1, %s385
          %s387 = sshll.u32 %s386, 4
          %s388 = int_to_ptr.hbm [resolvable:$true] %s387
          %s389 = sshll.u32 %s380, 4
          %s390 = int_to_ptr.vmem [resolvable:$true] %s389
          %395 = dma.hbm_to_vmem [thread:$0]  %s388, 64, %s390, %s377, 32, 32, 2
        $region48: #{tpu_custom_call.1} parent=39 // pred_fallthru
          _
        // Predicated region
        $region49: #{tpu_custom_call.1} parent=39 // pred_check
          %p396 = pneg %p118
        $region50: #{tpu_custom_call.1} parent=39 // pred_check_branch
          %398 = sbr.rel (%p396) target = $region52
        $region51: #{tpu_custom_call.1} parent=39 // pred_region
          %s399 = sand.u32 %s28, 1
          %s400 = scalar_lea.sflag [#allocation8], %s399
          %s401 = sand.u32 %s108, 1
          %s402 = smul.addr %s401, 2
          %s403 = scalar_lea.vmem [#allocation9], %s402
          %405 = vsyncadd %s400, 0
          %s406 = sadd.s32 %s36, %s35
          %s407 = smul.addr %s406, 2
          %s408 = scalar_lea.hbm %s2, %s407
          %s410 = sshll.u32 %s408, 4
          %s411 = int_to_ptr.hbm [resolvable:$true] %s410
          %s412 = sshll.u32 %s403, 4
          %s413 = int_to_ptr.vmem [resolvable:$true] %s412
          %415 = dma.hbm_to_vmem [thread:$0]  %s411, 32, %s413, %s400
        $region52: #{tpu_custom_call.1} parent=39 // pred_fallthru
          _
      $region40: #{tpu_custom_call.1} parent=5 // pred_fallthru
        _
      %p416 = scmp.le.s32.totalorder 1, %s28
      %p417 = scmp.lt.s32.totalorder %s28, 3
      %p418 = pnand %p416, %p417
      %p419 = pneg %p418
      // Predicated region
      $region53: #{tpu_custom_call.1} parent=5 // pred_check
        _
      $region54: #{tpu_custom_call.1} parent=5 // pred_check_branch
        %421 = sbr.rel (%p418) target = $region56
      $region55: #{tpu_custom_call.1} parent=5 // pred_region
        %s422 = ssub.s32 %s28, 1
        %s423 = sand.u32 %s55, 1
        %s424 = scalar_lea.sflag [#allocation4], %s423
        %s425 = sand.u32 %s55, 1
        %s426 = smul.addr %s425, 8
        %s427 = scalar_lea.vmem [#allocation3], %s426
        // Predicated region
        $region57: #{tpu_custom_call.1} parent=55 // pred_check
          %p428 = pneg %p68
        $region58: #{tpu_custom_call.1} parent=55 // pred_check_branch
          %430 = sbr.rel (%p428) target = $region60
        $region59: #{tpu_custom_call.1} parent=55 // pred_region
          %432 = dma.done %s424, 128
        $region60: #{tpu_custom_call.1} parent=55 // pred_fallthru
          _
        %s433 = sand.u32 %s33, 1
        %s434 = scalar_lea.sflag [#allocation8], %s433
        %s435 = sand.u32 %s83, 1
        %s436 = smul.addr %s435, 4
        %s437 = scalar_lea.vmem [#allocation7], %s436
        // Predicated region
        $region61: #{tpu_custom_call.1} parent=55 // pred_check
          %p438 = pneg %p96
        $region62: #{tpu_custom_call.1} parent=55 // pred_check_branch
          %440 = sbr.rel (%p438) target = $region64
        $region63: #{tpu_custom_call.1} parent=55 // pred_region
          %442 = dma.done %s434, 64
        $region64: #{tpu_custom_call.1} parent=55 // pred_fallthru
          _
        %s443 = sand.u32 %s33, 1
        %s444 = scalar_lea.sflag [#allocation8], %s443
        %s445 = sand.u32 %s111, 1
        %s446 = smul.addr %s445, 2
        %s447 = scalar_lea.vmem [#allocation9], %s446
        // Predicated region
        $region65: #{tpu_custom_call.1} parent=55 // pred_check
          %p448 = pneg %p124
        $region66: #{tpu_custom_call.1} parent=55 // pred_check_branch
          %450 = sbr.rel (%p448) target = $region68
        $region67: #{tpu_custom_call.1} parent=55 // pred_region
          %452 = dma.done %s444, 32
        $region68: #{tpu_custom_call.1} parent=55 // pred_fallthru
          _
        // Predicated region
        $region69: #{tpu_custom_call.1} parent=55 // pred_check
          %p453 = pneg %p145
        $region70: #{tpu_custom_call.1} parent=55 // pred_check_branch
          %455 = sbr.rel (%p453) target = $region72
        $region71: #{tpu_custom_call.1} parent=55 // pred_region
          %457 = dma.done [#allocation6], 16
        $region72: #{tpu_custom_call.1} parent=55 // pred_fallthru
          _
        // Predicated region
        $region73: #{tpu_custom_call.1} parent=55 // pred_check
          %p458 = pneg %p166
        $region74: #{tpu_custom_call.1} parent=55 // pred_check_branch
          %460 = sbr.rel (%p458) target = $region76
        $region75: #{tpu_custom_call.1} parent=55 // pred_region
          %462 = dma.done [#allocation12], 16
        $region76: #{tpu_custom_call.1} parent=55 // pred_fallthru
          _
        // Predicated region
        $region77: #{tpu_custom_call.1} parent=55 // pred_check
          %p463 = pneg %p187
        $region78: #{tpu_custom_call.1} parent=55 // pred_check_branch
          %465 = sbr.rel (%p463) target = $region80
        $region79: #{tpu_custom_call.1} parent=55 // pred_region
          %467 = dma.done [#allocation12], 16
        $region80: #{tpu_custom_call.1} parent=55 // pred_fallthru
          _
        // Predicated region
        $region81: #{tpu_custom_call.1} parent=55 // pred_check
          %p468 = pneg %p208
        $region82: #{tpu_custom_call.1} parent=55 // pred_check_branch
          %470 = sbr.rel (%p468) target = $region84
        $region83: #{tpu_custom_call.1} parent=55 // pred_region
          %472 = dma.done [#allocation15], 16
        $region84: #{tpu_custom_call.1} parent=55 // pred_fallthru
          _
        // Predicated region
        $region85: #{tpu_custom_call.1} parent=55 // pred_check
          %p473 = pneg %p229
        $region86: #{tpu_custom_call.1} parent=55 // pred_check_branch
          %475 = sbr.rel (%p473) target = $region88
        $region87: #{tpu_custom_call.1} parent=55 // pred_region
          %477 = dma.done [#allocation15], 16
        $region88: #{tpu_custom_call.1} parent=55 // pred_fallthru
          _
        %478 = sfence
        %s479 = sand.u32 %s55, 1
        %s480 = scalar_lea.sflag [#allocation4], %s479
        %s481 = sand.u32 %s55, 1
        %s482 = smul.addr %s481, 8
        %s483 = scalar_lea.vmem [#allocation3], %s482
        %p484 = pneg %p68
        %p485 = pneg %p65
        %s486 = sand.u32 %s33, 1
        %s487 = scalar_lea.sflag [#allocation8], %s486
        %s488 = sand.u32 %s83, 1
        %s489 = smul.addr %s488, 4
        %s490 = scalar_lea.vmem [#allocation7], %s489
        %p491 = pneg %p96
        %p492 = pneg %p93
        %s493 = sand.u32 %s33, 1
        %s494 = scalar_lea.sflag [#allocation8], %s493
        %s495 = sand.u32 %s111, 1
        %s496 = smul.addr %s495, 2
        %s497 = scalar_lea.vmem [#allocation9], %s496
        %p498 = pneg %p124
        %p499 = pneg %p121
        %p500 = pneg %p145
        %p501 = pneg %p142
        %p502 = pneg %p166
        %p503 = pneg %p163
        %p504 = pneg %p187
        %p505 = pneg %p184
        %p506 = pneg %p208
        %p507 = pneg %p205
        %p508 = pneg %p229
        %p509 = pneg %p226
        %p510 = pneg %p250
        %p511 = pneg %p247
        %p512 = pneg %p278
        %p513 = pneg %p275
        %s514 = sand.u32 %s265, 1
        %s515 = scalar_lea.sflag [#allocation5], %s514
        %s516 = sand.u32 %s265, 1
        %s517 = smul.addr %s516, 8
        %s518 = scalar_lea.vmem [#allocation17], %s517
        %v519 = vld [vmem:[%s447] sm:$0x3]
        %v520 = vsub.f32 0.0, %v519
        %v521 = vmul.f32 %v520, 1.442695
        %v522 = vpow.pop %v521
        %v523 = vld [vmem:[%s427] sm:$0x3]
        %v524 = vmul.f32 %v523, %v522
        %s525 = scalar_lea.vmem %s427, 2 [#allocation3]
        %v526 = vld [vmem:[%s525] sm:$0x3]
        %v527 = vmul.f32 %v526, %v522
        %s528 = scalar_lea.vmem %s427, 4 [#allocation3]
        %v529 = vld [vmem:[%s528] sm:$0x3]
        %v530 = vmul.f32 %v529, %v522
        %s531 = scalar_lea.vmem %s427, 6 [#allocation3]
        %v532 = vld [vmem:[%s531] sm:$0x3]
        %v533 = vmul.f32 %v532, %v522
        %v534 = vld [vmem:[%s437] sm:$0x3]
        %s535 = scalar_lea.vmem %s437, 2 [#allocation7]
        %v536 = vld [vmem:[%s535] sm:$0x3]
        %s537 = sld [smem:[#allocation10]]
        %v538 = vstv %s537
        %v539 = vmul.f32 %v524, %v538
        %s540 = sld [smem:[#allocation10 + $0x1]]
        %v541 = vstv %s540
        %v542 = vmul.f32 %v527, %v541
        %v543 = vadd.f32 %v539, %v542
        %s544 = sld [smem:[#allocation10 + $0x2]]
        %v545 = vstv %s544
        %v546 = vmul.f32 %v530, %v545
        %v547 = vadd.f32 %v543, %v546
        %s548 = sld [smem:[#allocation10 + $0x3]]
        %v549 = vstv %s548
        %v550 = vmul.f32 %v533, %v549
        %v551 = vadd.f32 %v547, %v550
        %s552 = sld [smem:[#allocation13]]
        %v553 = vstv %s552
        %v554 = vmul.f32 %v534, %v553
        %v555 = vadd.f32 %v551, %v554
        %s556 = sld [smem:[#allocation13 + $0x1]]
        %v557 = vstv %s556
        %v558 = vmul.f32 %v536, %v557
        %v559 = vadd.f32 %v555, %v558
        %s560 = sld [smem:[#allocation11]]
        %s561 = sld [smem:[#allocation14]]
        %s562 = sadd.f32 %s560, %s561
        %v563 = vstv %s562
        %v564 = vadd.f32 %v559, %v563
        %v565 = vmax.f32 %v564, 0.0
        %s566 = sld [smem:[#allocation16]]
        %v567 = vstv %s566
        %v568 = vmul.f32 %v565, %v567
        %s569 = sld [smem:[#allocation10 + $0x4]]
        %v570 = vstv %s569
        %v571 = vmul.f32 %v524, %v570
        %s572 = sld [smem:[#allocation10 + $0x5]]
        %v573 = vstv %s572
        %v574 = vmul.f32 %v527, %v573
        %v575 = vadd.f32 %v571, %v574
        %s576 = sld [smem:[#allocation10 + $0x6]]
        %v577 = vstv %s576
        %v578 = vmul.f32 %v530, %v577
        %v579 = vadd.f32 %v575, %v578
        %s580 = sld [smem:[#allocation10 + $0x7]]
        %v581 = vstv %s580
        %v582 = vmul.f32 %v533, %v581
        %v583 = vadd.f32 %v579, %v582
        %s584 = sld [smem:[#allocation13 + $0x2]]
        %v585 = vstv %s584
        %v586 = vmul.f32 %v534, %v585
        %v587 = vadd.f32 %v583, %v586
        %s588 = sld [smem:[#allocation13 + $0x3]]
        %v589 = vstv %s588
        %v590 = vmul.f32 %v536, %v589
        %v591 = vadd.f32 %v587, %v590
        %s592 = sld [smem:[#allocation11 + $0x1]]
        %s593 = sld [smem:[#allocation14 + $0x1]]
        %s594 = sadd.f32 %s592, %s593
        %v595 = vstv %s594
        %v596 = vadd.f32 %v591, %v595
        %v597 = vmax.f32 %v596, 0.0
        %s598 = sld [smem:[#allocation16 + $0x1]]
        %v599 = vstv %s598
        %v600 = vmul.f32 %v597, %v599
        %v601 = vadd.f32 %v568, %v600
        %s602 = sld [smem:[#allocation10 + $0x8]]
        %v603 = vstv %s602
        %v604 = vmul.f32 %v524, %v603
        %s605 = sld [smem:[#allocation10 + $0x9]]
        %v606 = vstv %s605
        %v607 = vmul.f32 %v527, %v606
        %v608 = vadd.f32 %v604, %v607
        %s609 = sld [smem:[#allocation10 + $0xa]]
        %v610 = vstv %s609
        %v611 = vmul.f32 %v530, %v610
        %v612 = vadd.f32 %v608, %v611
        %s613 = sld [smem:[#allocation10 + $0xb]]
        %v614 = vstv %s613
        %v615 = vmul.f32 %v533, %v614
        %v616 = vadd.f32 %v612, %v615
        %s617 = sld [smem:[#allocation13 + $0x4]]
        %v618 = vstv %s617
        %v619 = vmul.f32 %v534, %v618
        %v620 = vadd.f32 %v616, %v619
        %s621 = sld [smem:[#allocation13 + $0x5]]
        %v622 = vstv %s621
        %v623 = vmul.f32 %v536, %v622
        %v624 = vadd.f32 %v620, %v623
        %s625 = sld [smem:[#allocation11 + $0x2]]
        %s626 = sld [smem:[#allocation14 + $0x2]]
        %s627 = sadd.f32 %s625, %s626
        %v628 = vstv %s627
        %v629 = vadd.f32 %v624, %v628
        %v630 = vmax.f32 %v629, 0.0
        %s631 = sld [smem:[#allocation16 + $0x2]]
        %v632 = vstv %s631
        %v633 = vmul.f32 %v630, %v632
        %v634 = vadd.f32 %v601, %v633
        %s635 = sld [smem:[#allocation10 + $0xc]]
        %v636 = vstv %s635
        %v637 = vmul.f32 %v524, %v636
        %s638 = sld [smem:[#allocation10 + $0xd]]
        %v639 = vstv %s638
        %v640 = vmul.f32 %v527, %v639
        %v641 = vadd.f32 %v637, %v640
        %s642 = sld [smem:[#allocation10 + $0xe]]
        %v643 = vstv %s642
        %v644 = vmul.f32 %v530, %v643
        %v645 = vadd.f32 %v641, %v644
        %s646 = sld [smem:[#allocation10 + $0xf]]
        %v647 = vstv %s646
        %v648 = vmul.f32 %v533, %v647
        %v649 = vadd.f32 %v645, %v648
        %s650 = sld [smem:[#allocation13 + $0x6]]
        %v651 = vstv %s650
        %v652 = vmul.f32 %v534, %v651
        %v653 = vadd.f32 %v649, %v652
        %s654 = sld [smem:[#allocation13 + $0x7]]
        %v655 = vstv %s654
        %v656 = vmul.f32 %v536, %v655
        %v657 = vadd.f32 %v653, %v656
        %s658 = sld [smem:[#allocation11 + $0x3]]
        %s659 = sld [smem:[#allocation14 + $0x3]]
        %s660 = sadd.f32 %s658, %s659
        %v661 = vstv %s660
        %v662 = vadd.f32 %v657, %v661
        %v663 = vmax.f32 %v662, 0.0
        %s664 = sld [smem:[#allocation16 + $0x3]]
        %v665 = vstv %s664
        %v666 = vmul.f32 %v663, %v665
        %v667 = vadd.f32 %v634, %v666
        %s668 = sld [smem:[#allocation10 + $0x10]]
        %v669 = vstv %s668
        %v670 = vmul.f32 %v524, %v669
        %s671 = sld [smem:[#allocation10 + $0x11]]
        %v672 = vstv %s671
        %v673 = vmul.f32 %v527, %v672
        %v674 = vadd.f32 %v670, %v673
        %s675 = sld [smem:[#allocation10 + $0x12]]
        %v676 = vstv %s675
        %v677 = vmul.f32 %v530, %v676
        %v678 = vadd.f32 %v674, %v677
        %s679 = sld [smem:[#allocation10 + $0x13]]
        %v680 = vstv %s679
        %v681 = vmul.f32 %v533, %v680
        %v682 = vadd.f32 %v678, %v681
        %s683 = sld [smem:[#allocation13 + $0x8]]
        %v684 = vstv %s683
        %v685 = vmul.f32 %v534, %v684
        %v686 = vadd.f32 %v682, %v685
        %s687 = sld [smem:[#allocation13 + $0x9]]
        %v688 = vstv %s687
        %v689 = vmul.f32 %v536, %v688
        %v690 = vadd.f32 %v686, %v689
        %s691 = sld [smem:[#allocation11 + $0x4]]
        %s692 = sld [smem:[#allocation14 + $0x4]]
        %s693 = sadd.f32 %s691, %s692
        %v694 = vstv %s693
        %v695 = vadd.f32 %v690, %v694
        %v696 = vmax.f32 %v695, 0.0
        %s697 = sld [smem:[#allocation16 + $0x4]]
        %v698 = vstv %s697
        %v699 = vmul.f32 %v696, %v698
        %v700 = vadd.f32 %v667, %v699
        %s701 = sld [smem:[#allocation10 + $0x14]]
        %v702 = vstv %s701
        %v703 = vmul.f32 %v524, %v702
        %s704 = sld [smem:[#allocation10 + $0x15]]
        %v705 = vstv %s704
        %v706 = vmul.f32 %v527, %v705
        %v707 = vadd.f32 %v703, %v706
        %s708 = sld [smem:[#allocation10 + $0x16]]
        %v709 = vstv %s708
        %v710 = vmul.f32 %v530, %v709
        %v711 = vadd.f32 %v707, %v710
        %s712 = sld [smem:[#allocation10 + $0x17]]
        %v713 = vstv %s712
        %v714 = vmul.f32 %v533, %v713
        %v715 = vadd.f32 %v711, %v714
        %s716 = sld [smem:[#allocation13 + $0xa]]
        %v717 = vstv %s716
        %v718 = vmul.f32 %v534, %v717
        %v719 = vadd.f32 %v715, %v718
        %s720 = sld [smem:[#allocation13 + $0xb]]
        %v721 = vstv %s720
        %v722 = vmul.f32 %v536, %v721
        %v723 = vadd.f32 %v719, %v722
        %s724 = sld [smem:[#allocation11 + $0x5]]
        %s725 = sld [smem:[#allocation14 + $0x5]]
        %s726 = sadd.f32 %s724, %s725
        %v727 = vstv %s726
        %v728 = vadd.f32 %v723, %v727
        %v729 = vmax.f32 %v728, 0.0
        %s730 = sld [smem:[#allocation16 + $0x5]]
        %v731 = vstv %s730
        %v732 = vmul.f32 %v729, %v731
        %v733 = vadd.f32 %v700, %v732
        %s734 = sld [smem:[#allocation10 + $0x18]]
        %v735 = vstv %s734
        %v736 = vmul.f32 %v524, %v735
        %s737 = sld [smem:[#allocation10 + $0x19]]
        %v738 = vstv %s737
        %v739 = vmul.f32 %v527, %v738
        %v740 = vadd.f32 %v736, %v739
        %s741 = sld [smem:[#allocation10 + $0x1a]]
        %v742 = vstv %s741
        %v743 = vmul.f32 %v530, %v742
        %v744 = vadd.f32 %v740, %v743
        %s745 = sld [smem:[#allocation10 + $0x1b]]
        %v746 = vstv %s745
        %v747 = vmul.f32 %v533, %v746
        %v748 = vadd.f32 %v744, %v747
        %s749 = sld [smem:[#allocation13 + $0xc]]
        %v750 = vstv %s749
        %v751 = vmul.f32 %v534, %v750
        %v752 = vadd.f32 %v748, %v751
        %s753 = sld [smem:[#allocation13 + $0xd]]
        %v754 = vstv %s753
        %v755 = vmul.f32 %v536, %v754
        %v756 = vadd.f32 %v752, %v755
        %s757 = sld [smem:[#allocation11 + $0x6]]
        %s758 = sld [smem:[#allocation14 + $0x6]]
        %s759 = sadd.f32 %s757, %s758
        %v760 = vstv %s759
        %v761 = vadd.f32 %v756, %v760
        %v762 = vmax.f32 %v761, 0.0
        %s763 = sld [smem:[#allocation16 + $0x6]]
        %v764 = vstv %s763
        %v765 = vmul.f32 %v762, %v764
        %v766 = vadd.f32 %v733, %v765
        %s767 = sld [smem:[#allocation10 + $0x1c]]
        %v768 = vstv %s767
        %v769 = vmul.f32 %v524, %v768
        %s770 = sld [smem:[#allocation10 + $0x1d]]
        %v771 = vstv %s770
        %v772 = vmul.f32 %v527, %v771
        %v773 = vadd.f32 %v769, %v772
        %s774 = sld [smem:[#allocation10 + $0x1e]]
        %v775 = vstv %s774
        %v776 = vmul.f32 %v530, %v775
        %v777 = vadd.f32 %v773, %v776
        %s778 = sld [smem:[#allocation10 + $0x1f]]
        %v779 = vstv %s778
        %v780 = vmul.f32 %v533, %v779
        %v781 = vadd.f32 %v777, %v780
        %s782 = sld [smem:[#allocation13 + $0xe]]
        %v783 = vstv %s782
        %v784 = vmul.f32 %v534, %v783
        %v785 = vadd.f32 %v781, %v784
        %s786 = sld [smem:[#allocation13 + $0xf]]
        %v787 = vstv %s786
        %v788 = vmul.f32 %v536, %v787
        %v789 = vadd.f32 %v785, %v788
        %s790 = sld [smem:[#allocation11 + $0x7]]
        %s791 = sld [smem:[#allocation14 + $0x7]]
        %s792 = sadd.f32 %s790, %s791
        %v793 = vstv %s792
        %v794 = vadd.f32 %v789, %v793
        %v795 = vmax.f32 %v794, 0.0
        %s796 = sld [smem:[#allocation16 + $0x7]]
        %v797 = vstv %s796
        %v798 = vmul.f32 %v795, %v797
        %v799 = vadd.f32 %v766, %v798
        %s800 = sld [smem:[#allocation2]]
        %v801 = vstv %s800
        %v802 = vadd.f32 %v799, %v801
        %v803 = vsub.f32 0.0, %v802
        %v804 = vmul.f32 %v803, 1.442695
        %v805 = vpow.pop %v804
        %v806 = vadd.f32 %v805, 1.0
        %v807 = vrcp.pop %v806
        %v808 = vmul.f32 %v806, %v807
        %v809 = vsub.f32 1.0, %v808
        %v810 = vmul.f32 %v807, %v809
        %v811 = vadd.f32 %v807, %v810
        %vm812 = vweird.f32 %v806
        %vm813 = vweird.f32 %v807
        %vm814 = vmor %vm812, %vm813
        %v815 = vsel %vm814, %v807, %v811
        %v816 = vand.u32 2147483647, %v806
        %vm817 = vcmp.eq.f32.partialorder %v816, 8.507059e+37
        %v818 = vand.u32 %v806, 2147483648
        %v819 = vor.u32 1.1754944e-38, %v818
        %v820 = vsel %vm817, %v819, %v815
        %v821 = vmul.f32 1.0, %v820
        %v822 = vmul.f32 %v524, %v821
        %823 = vst [vmem:[%s518] sm:$0x3] %v822
        %v824 = vmul.f32 %v527, %v821
        %s825 = scalar_lea.vmem %s518, 2 [#allocation17]
        %826 = vst [vmem:[%s825] sm:$0x3] %v824
        %v827 = vmul.f32 %v530, %v821
        %s828 = scalar_lea.vmem %s518, 4 [#allocation17]
        %829 = vst [vmem:[%s828] sm:$0x3] %v827
        %v830 = vmul.f32 %v533, %v821
        %s831 = scalar_lea.vmem %s518, 6 [#allocation17]
        %832 = vst [vmem:[%s831] sm:$0x3] %v830
        %s833 = sand.u32 %s265, 1
        %s834 = scalar_lea.sflag [#allocation5], %s833
        %s835 = sand.u32 %s265, 1
        %s836 = smul.addr %s835, 8
        %s837 = scalar_lea.vmem [#allocation17], %s836
        // Predicated region
        $region89: #{tpu_custom_call.1} parent=55 // pred_check
          %p838 = pneg %p275
        $region90: #{tpu_custom_call.1} parent=55 // pred_check_branch
          %840 = sbr.rel (%p838) target = $region92
        $region91: #{tpu_custom_call.1} parent=55 // pred_region
          %842 = vsyncadd %s834, 0
          %s843 = smul.addr %s37, 4
          %s844 = sadd.s32 %s38, %s843
          %s845 = smul.addr %s844, 2
          %s846 = scalar_lea.hbm %s9, %s845
          %s847 = sshll.u32 %s837, 4
          %s848 = int_to_ptr.vmem [resolvable:$true] %s847
          %s849 = sshll.u32 %s846, 4
          %s850 = int_to_ptr.hbm [resolvable:$true] %s849
          %855 = dma.vmem_to_hbm [thread:$0]  %s848, 128, %s850, %s834, 32, 32, 2
        $region92: #{tpu_custom_call.1} parent=55 // pred_fallthru
          _
      $region56: #{tpu_custom_call.1} parent=5 // pred_fallthru
        _
      %p856 = scmp.le.s32.totalorder 2, %s28
      // Predicated region
      $region93: #{tpu_custom_call.1} parent=5 // pred_check
        %p857 = pneg %p856
      $region94: #{tpu_custom_call.1} parent=5 // pred_check_branch
        %859 = sbr.rel (%p857) target = $region96
      $region95: #{tpu_custom_call.1} parent=5 // pred_region
        %s860 = ssub.s32 %s28, 2
        // Predicated region
        $region97: #{tpu_custom_call.1} parent=95 // pred_check
          %p861 = pneg %p281
        $region98: #{tpu_custom_call.1} parent=95 // pred_check_branch
          %863 = sbr.rel (%p861) target = $region100
        $region99: #{tpu_custom_call.1} parent=95 // pred_region
          %s864 = sand.u32 %s266, 1
          %s865 = scalar_lea.sflag [#allocation5], %s864
          %s866 = sand.u32 %s266, 1
          %s867 = smul.addr %s866, 8
          %s868 = scalar_lea.vmem [#allocation17], %s867
          %870 = dma.done %s865, 128
        $region100: #{tpu_custom_call.1} parent=95 // pred_fallthru
          _
      $region96: #{tpu_custom_call.1} parent=5 // pred_fallthru
        _
    $region6: #{tpu_custom_call.1} parent=1 // loop_footer
      %s32 = sadd.s32 1, %s28
    $region7: #{tpu_custom_call.1} parent=1 // loop_footer_branch
      %27 = sbr.rel target = $region3
    $region8: #{tpu_custom_call.1} parent=1 // loop_exit
      _
    %871 = vsyncpa [#allocation4], 1
    %s872 = scalar_lea.sflag [#allocation4], 1
    %873 = vsyncpa %s872, 1
    %874 = vsyncpa [#allocation8], 1
    %s875 = scalar_lea.sflag [#allocation8], 1
    %876 = vsyncpa %s875, 1
    %877 = vsyncpa [#allocation5], 1
    %s878 = scalar_lea.sflag [#allocation5], 1
    %879 = vsyncpa %s878, 1
    %880 = vsyncpa [#allocation6], 1
    %s881 = scalar_lea.sflag [#allocation6], 1
    %882 = vsyncpa %s881, 1
    %883 = vsyncpa [#allocation12], 1
    %884 = vsyncpa [#allocation15], 1

</llo_original>
